<compile_context>
chip_gen: v7x
topology: tpu7x:2x2x1
jax: 0.10.0
libtpu: 0.0.40
codegen_flags: <defaults>
</compile_context>

<pallas_src>
import jax
import jax.numpy as jnp
import numpy as np
from jax.experimental import pallas as pl
from jax.experimental.pallas import tpu as pltpu

# ---------------- configuration (module defaults, small shapes) --------------
B = 2            # batch
N = 8            # sequence length
DIM = 32         # model dim
HEADS = 4        # heads
DH = 16          # dim_head
NNK = 2          # num_null_kv
SCALE = 8.0      # attention scale (module default scale=8)
LN_EPS = 1e-5    # F.layer_norm default eps
L2_EPS = 1e-12   # F.normalize default eps
INNER = HEADS * DH

TAIL = 8                  # sublane-aligned null-kv tail (NNK real rows + pad)
NEG_INF = -1e30

# MXU operand dtype: bf16 inputs, f32 accumulation (set to jnp.float32 for
# bit-closer parity with the f32 PyTorch reference).
MXU_DTYPE = jnp.bfloat16


# ------------------------------- kernel --------------------------------------
def attention_kernel(x_ref, vec_ref, wqkv_ref, wo_ref, ktail_ref, vtail_ref,
                     o_ref):
    vec = vec_ref[...]                      # (4, DIM) packed constants (f32)
    gamma = vec[0]                          # (DIM,)
    q_scale = vec[1, :DH]                   # (DH,)  -- already includes SCALE
    k_scale = vec[2, :DH]                   # (DH,)
    tail_bias = vec[3, :TAIL]               # (TAIL,) 0 for null-kv, -1e30 pad

    # ---- LayerNorm over the model dim (beta is zero), f32 -------------------
    x = x_ref[0]                                              # (N, DIM)
    mean = jnp.mean(x, axis=-1, keepdims=True)
    var = jnp.mean((x - mean) ** 2, axis=-1, keepdims=True)
    xn = (x - mean) * jax.lax.rsqrt(var + LN_EPS) * gamma     # (N, DIM)

    # ---- single lane-dense fused QKV matmul (bf16 operands, f32 acc) --------
    qkv = jnp.dot(xn.astype(MXU_DTYPE), wqkv_ref[...],
                  preferred_element_type=jnp.float32)         # (N, 3*INNER)

    def heads_first(t):                     # (N, INNER) -> (HEADS, N, DH)
        return t.reshape(N, HEADS, DH).transpose(1, 0, 2)

    q = heads_first(qkv[:, :INNER])
    k = heads_first(qkv[:, INNER:2 * INNER])
    v = heads_first(qkv[:, 2 * INNER:])

    # ---- cosine-sim normalisation (rsqrt -> EUP), f32 ------------------------
    def l2norm(t):
        ss = jnp.sum(t * t, axis=-1, keepdims=True)
        return t * jax.lax.rsqrt(jnp.maximum(ss, L2_EPS * L2_EPS))

    qn = (l2norm(q) * q_scale).astype(MXU_DTYPE)              # SCALE folded in
    kn = (l2norm(k) * k_scale).astype(MXU_DTYPE)

    # ---- attention: real keys + pre-normalized null-kv tail, no concat ------
    sim_r = jnp.einsum('hnd,hmd->hnm', qn, kn,
                       preferred_element_type=jnp.float32)    # (H, N, N)
    sim_t = jnp.einsum('hnd,hmd->hnm', qn, ktail_ref[...],
                       preferred_element_type=jnp.float32)    # (H, N, TAIL)
    sim_t = sim_t + tail_bias                                 # mask pad columns

    m = jnp.maximum(jnp.max(sim_r, axis=-1, keepdims=True),
                    jnp.max(sim_t, axis=-1, keepdims=True))
    p_r = jnp.exp(sim_r - m)
    p_t = jnp.exp(sim_t - m)
    denom = (jnp.sum(p_r, axis=-1, keepdims=True)
             + jnp.sum(p_t, axis=-1, keepdims=True))          # (H, N, 1)

    num = (jnp.einsum('hnm,hmd->hnd', p_r.astype(MXU_DTYPE),
                      v.astype(MXU_DTYPE),
                      preferred_element_type=jnp.float32)
           + jnp.einsum('hnm,hmd->hnd', p_t.astype(MXU_DTYPE),
                        vtail_ref[...],
                        preferred_element_type=jnp.float32))  # (H, N, DH)
    out_h = num / denom                                       # exact division

    # ---- fused output projection: (N, H*DH) @ (H*DH, DIM) --------------------
    out_flat = out_h.transpose(1, 0, 2).reshape(N, INNER)     # head->lane relayout
    out = jnp.dot(out_flat.astype(MXU_DTYPE), wo_ref[...],
                  preferred_element_type=jnp.float32)         # (N, DIM)
    o_ref[0] = out.astype(o_ref.dtype)

    # TODO(synk): causal (ALiBi bias), external mask / attn_bias, and dropout
    # branches of the module are not exercised (defaults used) and are not
    # implemented in this kernel.


# ------------------------------- wrapper --------------------------------------
@jax.jit
def attention_forward(x, gamma, wq, wkv, wo, null_k, null_v, q_scale, k_scale):
    # -- one-time parameter re-packing (weights / constants only) -------------
    # fused lane-dense [Wq | Wk | Wv]: (DIM, 3*INNER)
    wqkv = jnp.concatenate([wq, wkv], axis=1).astype(MXU_DTYPE)
    wo_m = wo.astype(MXU_DTYPE)                               # (INNER, DIM)

    # packed small constants: gamma / (q_scale*SCALE) / k_scale / pad bias
    vec = jnp.zeros((4, DIM), jnp.float32)
    vec = vec.at[0].set(gamma[0])
    vec = vec.at[1, :DH].set(q_scale[0] * SCALE)
    vec = vec.at[2, :DH].set(k_scale[0])
    vec = vec.at[3, :TAIL].set(
        jnp.where(jnp.arange(TAIL) < NNK, 0.0, NEG_INF))

    # null-K tail pre-normalized & scaled (constant, hoisted out of the kernel)
    nk_norm = null_k / jnp.maximum(
        jnp.linalg.norm(null_k, axis=-1, keepdims=True), L2_EPS)
    ktail = jnp.zeros((HEADS, TAIL, DH), jnp.float32)
    ktail = ktail.at[:, :NNK].set(nk_norm * k_scale[0])
    vtail = jnp.zeros((HEADS, TAIL, DH), jnp.float32)
    vtail = vtail.at[:, :NNK].set(null_v)

    return pl.pallas_call(
        attention_kernel,
        out_shape=jax.ShapeDtypeStruct((B, N, DIM), jnp.float32),
        grid_spec=pltpu.PrefetchScalarGridSpec(
            num_scalar_prefetch=0,
            grid=(B,),                                        # parallel batch axis
            in_specs=[
                pl.BlockSpec((1, N, DIM), lambda b: (b, 0, 0)),          # x
                pl.BlockSpec((4, DIM), lambda b: (0, 0)),                # consts
                pl.BlockSpec((DIM, 3 * INNER), lambda b: (0, 0)),        # fused Wqkv
                pl.BlockSpec((INNER, DIM), lambda b: (0, 0)),            # Wo
                pl.BlockSpec((HEADS, TAIL, DH), lambda b: (0, 0, 0)),    # K tail
                pl.BlockSpec((HEADS, TAIL, DH), lambda b: (0, 0, 0)),    # V tail
            ],
            out_specs=pl.BlockSpec((1, N, DIM), lambda b: (b, 0, 0)),
        ),
        compiler_params=pltpu.CompilerParams(
            dimension_semantics=("parallel",)),
    )(x, vec, wqkv, wo_m, ktail.astype(MXU_DTYPE), vtail.astype(MXU_DTYPE))


# --------------------------- pure-JAX reference --------------------------------
def attention_reference(x, gamma, wq, wkv, wo, null_k, null_v, q_scale, k_scale):
    mean = jnp.mean(x, axis=-1, keepdims=True)
    var = jnp.mean((x - mean) ** 2, axis=-1, keepdims=True)
    xn = (x - mean) * jax.lax.rsqrt(var + LN_EPS) * gamma[0]

    q = xn @ wq
    kv = xn @ wkv
    k, v = kv[..., :INNER], kv[..., INNER:]

    def split_heads(t):
        return t.reshape(B, N, HEADS, DH).transpose(0, 2, 1, 3)   # (B, H, N, DH)

    q, k, v = map(split_heads, (q, k, v))
    nk = jnp.broadcast_to(null_k[None], (B, HEADS, NNK, DH))
    nv = jnp.broadcast_to(null_v[None], (B, HEADS, NNK, DH))
    k = jnp.concatenate([nk, k], axis=-2)
    v = jnp.concatenate([nv, v], axis=-2)

    def l2norm(t):
        return t / jnp.maximum(jnp.sqrt(jnp.sum(t * t, -1, keepdims=True)), L2_EPS)

    q = l2norm(q) * q_scale[0]
    k = l2norm(k) * k_scale[0]
    sim = jnp.einsum('bhid,bhjd->bhij', q, k) * SCALE
    attn = jax.nn.softmax(sim, axis=-1)
    out = jnp.einsum('bhij,bhjd->bhid', attn, v)
    out = out.transpose(0, 2, 1, 3).reshape(B, N, INNER)
    return out @ wo


# --------------------------------- main -----------------------------------------
if __name__ == "__main__":
    key = jax.random.PRNGKey(0)
    keys = jax.random.split(key, 8)

    x = jax.random.normal(keys[0], (B, N, DIM), dtype=jnp.float32)

    # deterministic synthetic parameters (shapes from Attention.__init__)
    gamma = 1.0 + 0.1 * jax.random.normal(keys[1], (1, DIM), dtype=jnp.float32)
    wq = 0.02 * jax.random.normal(keys[2], (DIM, INNER), dtype=jnp.float32)
    wkv = 0.02 * jax.random.normal(keys[3], (DIM, 2 * INNER), dtype=jnp.float32)
    wo = 0.02 * jax.random.normal(keys[4], (INNER, DIM), dtype=jnp.float32)
    # null_kv parameter is (heads, 2*num_null_kv, dim_head); 'h (n r) d' with r=2
    null_kv = jax.random.normal(keys[5], (HEADS, 2 * NNK, DH), dtype=jnp.float32)
    null_k = null_kv[:, 0::2, :]                                   # (H, NNK, DH)
    null_v = null_kv[:, 1::2, :]
    q_scale = 1.0 + 0.1 * jax.random.normal(keys[6], (1, DH), dtype=jnp.float32)
    k_scale = 1.0 + 0.1 * jax.random.normal(keys[7], (1, DH), dtype=jnp.float32)

    out = attention_forward(x, gamma, wq, wkv, wo, null_k, null_v,
                            q_scale, k_scale)
    out = jax.block_until_ready(out)

    ref = attention_reference(x, gamma, wq, wkv, wo, null_k, null_v,
                              q_scale, k_scale)
    # bf16 MXU operands (f32 accumulation) introduce ~1e-3 abs error at these
    # output magnitudes (~1e-2); 5e-3 keeps comfortable margin.
    np.testing.assert_allclose(np.asarray(out), np.asarray(ref),
                               rtol=5e-3, atol=5e-3)

    print("KERNEL_OK")
</pallas_src>

<mosaic_0001>
module attributes {stable_mosaic.version = 11 : i64} {
  func.func @attention_kernel(%arg0: i32, %arg1: memref<1x8x32xf32, #tpu.memory_space<vmem>>, %arg2: memref<4x32xf32, #tpu.memory_space<vmem>>, %arg3: memref<32x192xbf16, #tpu.memory_space<vmem>>, %arg4: memref<64x32xbf16, #tpu.memory_space<vmem>>, %arg5: memref<4x8x16xbf16, #tpu.memory_space<vmem>>, %arg6: memref<4x8x16xbf16, #tpu.memory_space<vmem>>, %arg7: memref<1x8x32xf32, #tpu.memory_space<vmem>>) attributes {dimension_semantics = [#tpu.dimension_semantics<parallel>], iteration_bounds = array<i64: 2>, scalar_prefetch = 0 : i64, scratch_operands = 0 : i64, tpu.core_type = #tpu.core_type<tc>, window_params = [{transform_indices = @transform_0, window_bounds = array<i64: 1, 8, 32>}, {pipeline_mode = #tpu.pipeline_mode<synchronous>, transform_indices = @transform_1, window_bounds = array<i64: 4, 32>}, {pipeline_mode = #tpu.pipeline_mode<synchronous>, transform_indices = @transform_2, window_bounds = array<i64: 32, 192>}, {pipeline_mode = #tpu.pipeline_mode<synchronous>, transform_indices = @transform_3, window_bounds = array<i64: 64, 32>}, {pipeline_mode = #tpu.pipeline_mode<synchronous>, transform_indices = @transform_4, window_bounds = array<i64: 4, 8, 16>}, {pipeline_mode = #tpu.pipeline_mode<synchronous>, transform_indices = @transform_5, window_bounds = array<i64: 4, 8, 16>}, {transform_indices = @transform_6, window_bounds = array<i64: 1, 8, 32>}]} {
    %c0 = arith.constant 0 : index
    %c0_0 = arith.constant 0 : index
    %0 = vector.load %arg2[%c0, %c0_0] : memref<4x32xf32, #tpu.memory_space<vmem>>, vector<4x32xf32>
    %1 = vector.extract_strided_slice %0 {offsets = [0, 0], sizes = [1, 32], strides = [1, 1]} : vector<4x32xf32> to vector<1x32xf32>
    %2 = vector.shape_cast %1 : vector<1x32xf32> to vector<32xf32>
    %3 = vector.extract_strided_slice %0 {offsets = [1, 0], sizes = [1, 16], strides = [1, 1]} : vector<4x32xf32> to vector<1x16xf32>
    %4 = vector.shape_cast %3 : vector<1x16xf32> to vector<16xf32>
    %5 = vector.extract_strided_slice %0 {offsets = [2, 0], sizes = [1, 16], strides = [1, 1]} : vector<4x32xf32> to vector<1x16xf32>
    %6 = vector.shape_cast %5 : vector<1x16xf32> to vector<16xf32>
    %7 = vector.extract_strided_slice %0 {offsets = [3, 0], sizes = [1, 8], strides = [1, 1]} : vector<4x32xf32> to vector<1x8xf32>
    %8 = vector.shape_cast %7 : vector<1x8xf32> to vector<8xf32>
    %c0_1 = arith.constant 0 : index
    %c0_2 = arith.constant 0 : index
    %c0_3 = arith.constant 0 : index
    %9 = vector.load %arg1[%c0_1, %c0_2, %c0_3] : memref<1x8x32xf32, #tpu.memory_space<vmem>>, vector<1x8x32xf32>
    %10 = vector.shape_cast %9 : vector<1x8x32xf32> to vector<8x32xf32>
    %cst = arith.constant dense<0.000000e+00> : vector<8xf32>
    %11 = vector.multi_reduction <add>, %10, %cst [1] : vector<8x32xf32> to vector<8xf32>
    %12 = vector.shape_cast %11 : vector<8xf32> to vector<8x1xf32>
    %cst_4 = arith.constant 3.200000e+01 : f32
    %13 = vector.broadcast %cst_4 : f32 to vector<8x1xf32>
    %14 = arith.divf %12, %13 : vector<8x1xf32>
    %15 = vector.broadcast %14 : vector<8x1xf32> to vector<8x32xf32>
    %16 = arith.subf %10, %15 : vector<8x32xf32>
    %17 = arith.mulf %16, %16 : vector<8x32xf32>
    %cst_5 = arith.constant dense<0.000000e+00> : vector<8xf32>
    %18 = vector.multi_reduction <add>, %17, %cst_5 [1] : vector<8x32xf32> to vector<8xf32>
    %19 = vector.shape_cast %18 : vector<8xf32> to vector<8x1xf32>
    %cst_6 = arith.constant 3.200000e+01 : f32
    %20 = vector.broadcast %cst_6 : f32 to vector<8x1xf32>
    %21 = arith.divf %19, %20 : vector<8x1xf32>
    %22 = vector.broadcast %14 : vector<8x1xf32> to vector<8x32xf32>
    %23 = arith.subf %10, %22 : vector<8x32xf32>
    %cst_7 = arith.constant 9.99999974E-6 : f32
    %24 = vector.broadcast %cst_7 : f32 to vector<8x1xf32>
    %25 = arith.addf %21, %24 : vector<8x1xf32>
    %26 = math.rsqrt %25 : vector<8x1xf32>
    %27 = vector.broadcast %26 : vector<8x1xf32> to vector<8x32xf32>
    %28 = arith.mulf %23, %27 : vector<8x32xf32>
    %29 = vector.shape_cast %2 : vector<32xf32> to vector<1x32xf32>
    %30 = vector.broadcast %29 : vector<1x32xf32> to vector<8x32xf32>
    %31 = arith.mulf %28, %30 : vector<8x32xf32>
    %32 = arith.truncf %31 : vector<8x32xf32> to vector<8x32xbf16>
    %c0_8 = arith.constant 0 : index
    %c0_9 = arith.constant 0 : index
    %33 = vector.load %arg3[%c0_8, %c0_9] : memref<32x192xbf16, #tpu.memory_space<vmem>>, vector<32x192xbf16>
    %cst_10 = arith.constant dense<0.000000e+00> : vector<8x192xf32>
    %34 = tpu.matmul %32, %33, %cst_10 {dimension_numbers = #tpu.dot_dimension_numbers<[1], [0], [0], [1], [0, 0, 1, 1], [], []>} : vector<8x32xbf16>, vector<32x192xbf16>, vector<8x192xf32> -> vector<8x192xf32>
    %35 = vector.extract_strided_slice %34 {offsets = [0, 0], sizes = [8, 64], strides = [1, 1]} : vector<8x192xf32> to vector<8x64xf32>
    %36 = vector.shape_cast %35 : vector<8x64xf32> to vector<8x4x16xf32>
    %37 = tpu.transpose %36, [1, 0, 2] : vector<8x4x16xf32> -> vector<4x8x16xf32>
    %38 = vector.extract_strided_slice %34 {offsets = [0, 64], sizes = [8, 64], strides = [1, 1]} : vector<8x192xf32> to vector<8x64xf32>
    %39 = vector.shape_cast %38 : vector<8x64xf32> to vector<8x4x16xf32>
    %40 = tpu.transpose %39, [1, 0, 2] : vector<8x4x16xf32> -> vector<4x8x16xf32>
    %41 = vector.extract_strided_slice %34 {offsets = [0, 128], sizes = [8, 64], strides = [1, 1]} : vector<8x192xf32> to vector<8x64xf32>
    %42 = vector.shape_cast %41 : vector<8x64xf32> to vector<8x4x16xf32>
    %43 = tpu.transpose %42, [1, 0, 2] : vector<8x4x16xf32> -> vector<4x8x16xf32>
    %44 = arith.mulf %37, %37 : vector<4x8x16xf32>
    %cst_11 = arith.constant dense<0.000000e+00> : vector<4x8xf32>
    %45 = vector.multi_reduction <add>, %44, %cst_11 [2] : vector<4x8x16xf32> to vector<4x8xf32>
    %46 = vector.shape_cast %45 : vector<4x8xf32> to vector<4x8x1xf32>
    %cst_12 = arith.constant 1.000000e-24 : f32
    %47 = vector.broadcast %cst_12 : f32 to vector<4x8x1xf32>
    %48 = arith.maximumf %46, %47 : vector<4x8x1xf32>
    %49 = math.rsqrt %48 : vector<4x8x1xf32>
    %50 = vector.broadcast %49 : vector<4x8x1xf32> to vector<4x8x16xf32>
    %51 = arith.mulf %37, %50 : vector<4x8x16xf32>
    %52 = vector.shape_cast %4 : vector<16xf32> to vector<1x1x16xf32>
    %53 = vector.broadcast %52 : vector<1x1x16xf32> to vector<4x8x16xf32>
    %54 = arith.mulf %51, %53 : vector<4x8x16xf32>
    %55 = arith.truncf %54 : vector<4x8x16xf32> to vector<4x8x16xbf16>
    %56 = arith.mulf %40, %40 : vector<4x8x16xf32>
    %cst_13 = arith.constant dense<0.000000e+00> : vector<4x8xf32>
    %57 = vector.multi_reduction <add>, %56, %cst_13 [2] : vector<4x8x16xf32> to vector<4x8xf32>
    %58 = vector.shape_cast %57 : vector<4x8xf32> to vector<4x8x1xf32>
    %cst_14 = arith.constant 1.000000e-24 : f32
    %59 = vector.broadcast %cst_14 : f32 to vector<4x8x1xf32>
    %60 = arith.maximumf %58, %59 : vector<4x8x1xf32>
    %61 = math.rsqrt %60 : vector<4x8x1xf32>
    %62 = vector.broadcast %61 : vector<4x8x1xf32> to vector<4x8x16xf32>
    %63 = arith.mulf %40, %62 : vector<4x8x16xf32>
    %64 = vector.shape_cast %6 : vector<16xf32> to vector<1x1x16xf32>
    %65 = vector.broadcast %64 : vector<1x1x16xf32> to vector<4x8x16xf32>
    %66 = arith.mulf %63, %65 : vector<4x8x16xf32>
    %67 = arith.truncf %66 : vector<4x8x16xf32> to vector<4x8x16xbf16>
    "tpu.trace_start"() <{level = 10 : i32, message = "hnd,hmd->hnm"}> : () -> ()
    %cst_15 = arith.constant dense<0.000000e+00> : vector<4x8x8xf32>
    %68 = tpu.matmul %55, %67, %cst_15 {dimension_numbers = #tpu.dot_dimension_numbers<[2], [2], [1], [1], [0, 0, 0, 1, 1, 1], [0], [0]>} : vector<4x8x16xbf16>, vector<4x8x16xbf16>, vector<4x8x8xf32> -> vector<4x8x8xf32>
    "tpu.trace_stop"() : () -> ()
    %c0_16 = arith.constant 0 : index
    %c0_17 = arith.constant 0 : index
    %c0_18 = arith.constant 0 : index
    %69 = vector.load %arg5[%c0_16, %c0_17, %c0_18] : memref<4x8x16xbf16, #tpu.memory_space<vmem>>, vector<4x8x16xbf16>
    "tpu.trace_start"() <{level = 10 : i32, message = "hnd,hmd->hnm"}> : () -> ()
    %cst_19 = arith.constant dense<0.000000e+00> : vector<4x8x8xf32>
    %70 = tpu.matmul %55, %69, %cst_19 {dimension_numbers = #tpu.dot_dimension_numbers<[2], [2], [1], [1], [0, 0, 0, 1, 1, 1], [0], [0]>} : vector<4x8x16xbf16>, vector<4x8x16xbf16>, vector<4x8x8xf32> -> vector<4x8x8xf32>
    "tpu.trace_stop"() : () -> ()
    %71 = vector.shape_cast %8 : vector<8xf32> to vector<1x1x8xf32>
    %72 = vector.broadcast %71 : vector<1x1x8xf32> to vector<4x8x8xf32>
    %73 = arith.addf %70, %72 : vector<4x8x8xf32>
    %cst_20 = arith.constant dense<0xFF800000> : vector<4x8xf32>
    %74 = vector.multi_reduction <maximumf>, %68, %cst_20 [2] : vector<4x8x8xf32> to vector<4x8xf32>
    %75 = vector.shape_cast %74 : vector<4x8xf32> to vector<4x8x1xf32>
    %cst_21 = arith.constant dense<0xFF800000> : vector<4x8xf32>
    %76 = vector.multi_reduction <maximumf>, %73, %cst_21 [2] : vector<4x8x8xf32> to vector<4x8xf32>
    %77 = vector.shape_cast %76 : vector<4x8xf32> to vector<4x8x1xf32>
    %78 = arith.maximumf %75, %77 : vector<4x8x1xf32>
    %79 = vector.broadcast %78 : vector<4x8x1xf32> to vector<4x8x8xf32>
    %80 = arith.subf %68, %79 : vector<4x8x8xf32>
    %81 = math.exp %80 : vector<4x8x8xf32>
    %82 = vector.broadcast %78 : vector<4x8x1xf32> to vector<4x8x8xf32>
    %83 = arith.subf %73, %82 : vector<4x8x8xf32>
    %84 = math.exp %83 : vector<4x8x8xf32>
    %cst_22 = arith.constant dense<0.000000e+00> : vector<4x8xf32>
    %85 = vector.multi_reduction <add>, %81, %cst_22 [2] : vector<4x8x8xf32> to vector<4x8xf32>
    %86 = vector.shape_cast %85 : vector<4x8xf32> to vector<4x8x1xf32>
    %cst_23 = arith.constant dense<0.000000e+00> : vector<4x8xf32>
    %87 = vector.multi_reduction <add>, %84, %cst_23 [2] : vector<4x8x8xf32> to vector<4x8xf32>
    %88 = vector.shape_cast %87 : vector<4x8xf32> to vector<4x8x1xf32>
    %89 = arith.addf %86, %88 : vector<4x8x1xf32>
    %90 = arith.truncf %81 : vector<4x8x8xf32> to vector<4x8x8xbf16>
    %91 = arith.truncf %43 : vector<4x8x16xf32> to vector<4x8x16xbf16>
    "tpu.trace_start"() <{level = 10 : i32, message = "hnm,hmd->hnd"}> : () -> ()
    %cst_24 = arith.constant dense<0.000000e+00> : vector<4x8x16xf32>
    %92 = tpu.matmul %90, %91, %cst_24 {dimension_numbers = #tpu.dot_dimension_numbers<[2], [1], [1], [2], [0, 0, 0, 1, 1, 2], [0], [0]>} : vector<4x8x8xbf16>, vector<4x8x16xbf16>, vector<4x8x16xf32> -> vector<4x8x16xf32>
    "tpu.trace_stop"() : () -> ()
    %93 = arith.truncf %84 : vector<4x8x8xf32> to vector<4x8x8xbf16>
    %c0_25 = arith.constant 0 : index
    %c0_26 = arith.constant 0 : index
    %c0_27 = arith.constant 0 : index
    %94 = vector.load %arg6[%c0_25, %c0_26, %c0_27] : memref<4x8x16xbf16, #tpu.memory_space<vmem>>, vector<4x8x16xbf16>
    "tpu.trace_start"() <{level = 10 : i32, message = "hnm,hmd->hnd"}> : () -> ()
    %cst_28 = arith.constant dense<0.000000e+00> : vector<4x8x16xf32>
    %95 = tpu.matmul %93, %94, %cst_28 {dimension_numbers = #tpu.dot_dimension_numbers<[2], [1], [1], [2], [0, 0, 0, 1, 1, 2], [0], [0]>} : vector<4x8x8xbf16>, vector<4x8x16xbf16>, vector<4x8x16xf32> -> vector<4x8x16xf32>
    "tpu.trace_stop"() : () -> ()
    %96 = arith.addf %92, %95 : vector<4x8x16xf32>
    %97 = vector.broadcast %89 : vector<4x8x1xf32> to vector<4x8x16xf32>
    %98 = arith.divf %96, %97 : vector<4x8x16xf32>
    %99 = tpu.transpose %98, [1, 0, 2] : vector<4x8x16xf32> -> vector<8x4x16xf32>
    %100 = vector.shape_cast %99 : vector<8x4x16xf32> to vector<8x64xf32>
    %101 = arith.truncf %100 : vector<8x64xf32> to vector<8x64xbf16>
    %c0_29 = arith.constant 0 : index
    %c0_30 = arith.constant 0 : index
    %102 = vector.load %arg4[%c0_29, %c0_30] : memref<64x32xbf16, #tpu.memory_space<vmem>>, vector<64x32xbf16>
    %cst_31 = arith.constant dense<0.000000e+00> : vector<8x32xf32>
    %103 = tpu.matmul %101, %102, %cst_31 {dimension_numbers = #tpu.dot_dimension_numbers<[1], [0], [0], [1], [0, 0, 1, 1], [], []>} : vector<8x64xbf16>, vector<64x32xbf16>, vector<8x32xf32> -> vector<8x32xf32>
    %c0_32 = arith.constant 0 : index
    %c0_33 = arith.constant 0 : index
    %c0_34 = arith.constant 0 : index
    %104 = vector.load %arg7[%c0_32, %c0_33, %c0_34] : memref<1x8x32xf32, #tpu.memory_space<vmem>>, vector<1x8x32xf32>
    %105 = vector.shape_cast %104 : vector<1x8x32xf32> to vector<8x32xf32>
    %106 = vector.shape_cast %103 : vector<8x32xf32> to vector<1x8x32xf32>
    tpu.vector_store %arg7[%c0_32, %c0_33, %c0_34], %106 {strides = array<i32>} : memref<1x8x32xf32, #tpu.memory_space<vmem>>, vector<1x8x32xf32>,
    return
  }
  func.func @transform_0(%arg0: i32) -> (i32, i32, i32) {
    %c0_i32 = arith.constant 0 : i32
    %c0_i32_0 = arith.constant 0 : i32
    %c0_i32_1 = arith.constant 0 : i32
    return %arg0, %c0_i32, %c0_i32_0 : i32, i32, i32
  }
  func.func @transform_1(%arg0: i32) -> (i32, i32) {
    %c0_i32 = arith.constant 0 : i32
    %c0_i32_0 = arith.constant 0 : i32
    %c0_i32_1 = arith.constant 0 : i32
    return %c0_i32, %c0_i32_0 : i32, i32
  }
  func.func @transform_2(%arg0: i32) -> (i32, i32) {
    %c0_i32 = arith.constant 0 : i32
    %c0_i32_0 = arith.constant 0 : i32
    %c0_i32_1 = arith.constant 0 : i32
    return %c0_i32, %c0_i32_0 : i32, i32
  }
  func.func @transform_3(%arg0: i32) -> (i32, i32) {
    %c0_i32 = arith.constant 0 : i32
    %c0_i32_0 = arith.constant 0 : i32
    %c0_i32_1 = arith.constant 0 : i32
    return %c0_i32, %c0_i32_0 : i32, i32
  }
  func.func @transform_4(%arg0: i32) -> (i32, i32, i32) {
    %c0_i32 = arith.constant 0 : i32
    %c0_i32_0 = arith.constant 0 : i32
    %c0_i32_1 = arith.constant 0 : i32
    %c0_i32_2 = arith.constant 0 : i32
    return %c0_i32, %c0_i32_0, %c0_i32_1 : i32, i32, i32
  }
  func.func @transform_5(%arg0: i32) -> (i32, i32, i32) {
    %c0_i32 = arith.constant 0 : i32
    %c0_i32_0 = arith.constant 0 : i32
    %c0_i32_1 = arith.constant 0 : i32
    %c0_i32_2 = arith.constant 0 : i32
    return %c0_i32, %c0_i32_0, %c0_i32_1 : i32, i32, i32
  }
  func.func @transform_6(%arg0: i32) -> (i32, i32, i32) {
    %c0_i32 = arith.constant 0 : i32
    %c0_i32_0 = arith.constant 0 : i32
    %c0_i32_1 = arith.constant 0 : i32
    return %arg0, %c0_i32, %c0_i32_0 : i32, i32, i32
  }
}

</mosaic_0001>

<llo_original>
// kernel: attention_forward.1
$region0: #{attention_forward.1}
  #allocation0 [shape = 'u32[]', space=smem, size = 0x4, offset = 0x4, fixed_abs, tag = 'smem constant byte address 0x4 - core index']
  #allocation1 [shape = 'u32[144,128]{1,0:T(1,128)}', space=vmem, size = 0x12000, scoped, tag = 'internal scratch']
  %s0 = inlined_call_operand.vmem [shape: f32[2,8,32], index: 0, kind: input, shape index: {}]
  %s1 = inlined_call_operand.vmem [shape: f32[4,32], index: 1, kind: input, shape index: {}]
  %s2 = inlined_call_operand.vmem [shape: bf16[32,192], index: 2, kind: input, shape index: {}]
  %s3 = inlined_call_operand.vmem [shape: bf16[64,32], index: 3, kind: input, shape index: {}]
  %s4 = inlined_call_operand.vmem [shape: bf16[4,8,16], index: 4, kind: input, shape index: {}]
  %s5 = inlined_call_operand.vmem [shape: bf16[4,8,16], index: 5, kind: input, shape index: {}]
  %s6 = inlined_call_operand.hbm [shape: f32[2,8,32], index: 6, kind: output, shape index: {}]
  %s7 = sld [smem:[#allocation0]]
  $region57: #{attention_forward.1} parent=0
    _
  %s9 = ssub.s32 1, %s7
  %s10 = scalar_select 0, %s9, %s7
  $region1: #{attention_forward.1} parent=0
    #allocation2 [shape = 'u8[8192]{0}', space=vmem, size = 0x2000, scoped, tag = 'output window, operand 0']
    #allocation3 [shape = 's32[2]{0}', space=sflag, size = 0x8, scoped, tag = 'scoped memory for attention_forward.1']
    %11 = vsyncpa [#allocation3], 0
    %s12 = scalar_lea.sflag [#allocation3], 1
    %13 = vsyncpa %s12, 0
    loop: start=0, step=1, limit=4
    $region2: #{attention_forward.1} parent=1 // loop_pre_header
      _
    $region3: #{attention_forward.1} parent=1 // loop_header
      %s15 = sphi 0, %s19
      %p16 = scmp.ge.s32.totalorder %s15, 4
      %s25 = sphi 0, %s27
      %s28 = sphi 0, %s25
      %s29 = sphi 0, %s28
      %s45 = sphi 0, %s29
      %s49 = sphi 0, %s49
      %s51 = sphi 0, %s49
      %s52 = sphi 0, %s51
      %s66 = sphi 0, %s52
      %s70 = sphi 0, %s70
      %s72 = sphi 0, %s70
      %s73 = sphi 0, %s72
      %s87 = sphi 0, %s73
      %s91 = sphi 0, %s91
      %s93 = sphi 0, %s91
      %s94 = sphi 0, %s93
      %s108 = sphi 0, %s94
      %s112 = sphi 0, %s112
      %s114 = sphi 0, %s112
      %s115 = sphi 0, %s114
      %s129 = sphi 0, %s115
      %s133 = sphi 0, %s133
      %s135 = sphi 0, %s133
      %s136 = sphi 0, %s135
      %s150 = sphi 0, %s136
      %s156 = sphi 0, %s158
      %s159 = sphi 0, %s156
      %s160 = sphi 0, %s159
      %s176 = sphi 0, %s160
    $region4: #{attention_forward.1} parent=1 // loop_header_branch
      %18 = sbr.rel (%p16) target = $region8
    $region5: #{attention_forward.1} parent=1 // loop_body
      %s20 = ssub.s32 %s15, 1
      %s21 = ssub.s32 %s15, 2
      %s22 = sadd.s32 %s15, 1
      %s23 = ssub.s32 %s15, %s22
      %p24 = scmp.eq.s32.totalorder %s23, 0
      %s26 = sadd.s32 %s25, 1
      %s27 = scalar_select %p24, %s25, %s26
      %p30 = pneg %p24
      %p31 = scmp.eq.s32.totalorder %s15, 1
      %p32 = por %p30, %p31
      %p33 = scmp.ne.s32.totalorder %s25, %s28
      %p34 = scmp.eq.s32.totalorder %s15, 0
      %p35 = por %p33, %p34
      %p36 = scmp.ne.s32.totalorder %s25, %s28
      %p37 = scmp.eq.s32.totalorder %s20, 1
      %p38 = por %p36, %p37
      %p39 = scmp.ne.s32.totalorder %s28, %s29
      %p40 = scmp.eq.s32.totalorder %s20, 0
      %p41 = por %p39, %p40
      %p42 = scmp.ne.s32.totalorder %s28, %s29
      %p43 = scmp.eq.s32.totalorder %s21, 1
      %p44 = por %p42, %p43
      %p46 = scmp.ne.s32.totalorder %s29, %s45
      %p47 = scmp.eq.s32.totalorder %s21, 0
      %p48 = por %p46, %p47
      %s50 = sadd.s32 %s49, 1
      %p53 = scmp.eq.s32.totalorder %s15, 1
      %p54 = scmp.ne.s32.totalorder %s49, %s51
      %p55 = scmp.eq.s32.totalorder %s15, 0
      %p56 = por %p54, %p55
      %p57 = scmp.ne.s32.totalorder %s49, %s51
      %p58 = scmp.eq.s32.totalorder %s20, 1
      %p59 = por %p57, %p58
      %p60 = scmp.ne.s32.totalorder %s51, %s52
      %p61 = scmp.eq.s32.totalorder %s20, 0
      %p62 = por %p60, %p61
      %p63 = scmp.ne.s32.totalorder %s51, %s52
      %p64 = scmp.eq.s32.totalorder %s21, 1
      %p65 = por %p63, %p64
      %p67 = scmp.ne.s32.totalorder %s52, %s66
      %p68 = scmp.eq.s32.totalorder %s21, 0
      %p69 = por %p67, %p68
      %s71 = sadd.s32 %s70, 1
      %p74 = scmp.eq.s32.totalorder %s15, 1
      %p75 = scmp.ne.s32.totalorder %s70, %s72
      %p76 = scmp.eq.s32.totalorder %s15, 0
      %p77 = por %p75, %p76
      %p78 = scmp.ne.s32.totalorder %s70, %s72
      %p79 = scmp.eq.s32.totalorder %s20, 1
      %p80 = por %p78, %p79
      %p81 = scmp.ne.s32.totalorder %s72, %s73
      %p82 = scmp.eq.s32.totalorder %s20, 0
      %p83 = por %p81, %p82
      %p84 = scmp.ne.s32.totalorder %s72, %s73
      %p85 = scmp.eq.s32.totalorder %s21, 1
      %p86 = por %p84, %p85
      %p88 = scmp.ne.s32.totalorder %s73, %s87
      %p89 = scmp.eq.s32.totalorder %s21, 0
      %p90 = por %p88, %p89
      %s92 = sadd.s32 %s91, 1
      %p95 = scmp.eq.s32.totalorder %s15, 1
      %p96 = scmp.ne.s32.totalorder %s91, %s93
      %p97 = scmp.eq.s32.totalorder %s15, 0
      %p98 = por %p96, %p97
      %p99 = scmp.ne.s32.totalorder %s91, %s93
      %p100 = scmp.eq.s32.totalorder %s20, 1
      %p101 = por %p99, %p100
      %p102 = scmp.ne.s32.totalorder %s93, %s94
      %p103 = scmp.eq.s32.totalorder %s20, 0
      %p104 = por %p102, %p103
      %p105 = scmp.ne.s32.totalorder %s93, %s94
      %p106 = scmp.eq.s32.totalorder %s21, 1
      %p107 = por %p105, %p106
      %p109 = scmp.ne.s32.totalorder %s94, %s108
      %p110 = scmp.eq.s32.totalorder %s21, 0
      %p111 = por %p109, %p110
      %s113 = sadd.s32 %s112, 1
      %p116 = scmp.eq.s32.totalorder %s15, 1
      %p117 = scmp.ne.s32.totalorder %s112, %s114
      %p118 = scmp.eq.s32.totalorder %s15, 0
      %p119 = por %p117, %p118
      %p120 = scmp.ne.s32.totalorder %s112, %s114
      %p121 = scmp.eq.s32.totalorder %s20, 1
      %p122 = por %p120, %p121
      %p123 = scmp.ne.s32.totalorder %s114, %s115
      %p124 = scmp.eq.s32.totalorder %s20, 0
      %p125 = por %p123, %p124
      %p126 = scmp.ne.s32.totalorder %s114, %s115
      %p127 = scmp.eq.s32.totalorder %s21, 1
      %p128 = por %p126, %p127
      %p130 = scmp.ne.s32.totalorder %s115, %s129
      %p131 = scmp.eq.s32.totalorder %s21, 0
      %p132 = por %p130, %p131
      %s134 = sadd.s32 %s133, 1
      %p137 = scmp.eq.s32.totalorder %s15, 1
      %p138 = scmp.ne.s32.totalorder %s133, %s135
      %p139 = scmp.eq.s32.totalorder %s15, 0
      %p140 = por %p138, %p139
      %p141 = scmp.ne.s32.totalorder %s133, %s135
      %p142 = scmp.eq.s32.totalorder %s20, 1
      %p143 = por %p141, %p142
      %p144 = scmp.ne.s32.totalorder %s135, %s136
      %p145 = scmp.eq.s32.totalorder %s20, 0
      %p146 = por %p144, %p145
      %p147 = scmp.ne.s32.totalorder %s135, %s136
      %p148 = scmp.eq.s32.totalorder %s21, 1
      %p149 = por %p147, %p148
      %p151 = scmp.ne.s32.totalorder %s136, %s150
      %p152 = scmp.eq.s32.totalorder %s21, 0
      %p153 = por %p151, %p152
      %s154 = ssub.s32 %s15, %s22
      %p155 = scmp.eq.s32.totalorder %s154, 0
      %s157 = sadd.s32 %s156, 1
      %s158 = scalar_select %p155, %s156, %s157
      %p161 = pneg %p155
      %p162 = scmp.eq.s32.totalorder %s15, 1
      %p163 = por %p161, %p162
      %p164 = scmp.ne.s32.totalorder %s156, %s159
      %p165 = scmp.eq.s32.totalorder %s15, 0
      %p166 = por %p164, %p165
      %p167 = scmp.ne.s32.totalorder %s156, %s159
      %p168 = scmp.eq.s32.totalorder %s20, 1
      %p169 = por %p167, %p168
      %p170 = scmp.ne.s32.totalorder %s159, %s160
      %p171 = scmp.eq.s32.totalorder %s20, 0
      %p172 = por %p170, %p171
      %p173 = scmp.ne.s32.totalorder %s159, %s160
      %p174 = scmp.eq.s32.totalorder %s21, 1
      %p175 = por %p173, %p174
      %p177 = scmp.ne.s32.totalorder %s160, %s176
      %p178 = scmp.eq.s32.totalorder %s21, 0
      %p179 = por %p177, %p178
      %p180 = scmp.le.s32.totalorder 1, %s15
      %p181 = scmp.lt.s32.totalorder %s15, 3
      %p182 = pnand %p180, %p181
      %p183 = pneg %p182
      // Predicated region
      $region9: #{attention_forward.1} parent=5 // pred_check
        _
      $region10: #{attention_forward.1} parent=5 // pred_check_branch
        %185 = sbr.rel (%p182) target = $region12
      $region11: #{attention_forward.1} parent=5 // pred_region
        %s186 = ssub.s32 %s15, 1
        // Predicated region
        $region13: #{attention_forward.1} parent=11 // pred_check
          %p187 = pneg %p62
        $region14: #{attention_forward.1} parent=11 // pred_check_branch
          %189 = sbr.rel (%p187) target = $region16
        $region15: #{attention_forward.1} parent=11 // pred_region
          _
        $region16: #{attention_forward.1} parent=11 // pred_fallthru
          _
        // Predicated region
        $region17: #{attention_forward.1} parent=11 // pred_check
          %p190 = pneg %p83
        $region18: #{attention_forward.1} parent=11 // pred_check_branch
          %192 = sbr.rel (%p190) target = $region20
        $region19: #{attention_forward.1} parent=11 // pred_region
          _
        $region20: #{attention_forward.1} parent=11 // pred_fallthru
          _
        // Predicated region
        $region21: #{attention_forward.1} parent=11 // pred_check
          %p193 = pneg %p104
        $region22: #{attention_forward.1} parent=11 // pred_check_branch
          %195 = sbr.rel (%p193) target = $region24
        $region23: #{attention_forward.1} parent=11 // pred_region
          _
        $region24: #{attention_forward.1} parent=11 // pred_fallthru
          _
        // Predicated region
        $region25: #{attention_forward.1} parent=11 // pred_check
          %p196 = pneg %p125
        $region26: #{attention_forward.1} parent=11 // pred_check_branch
          %198 = sbr.rel (%p196) target = $region28
        $region27: #{attention_forward.1} parent=11 // pred_region
          _
        $region28: #{attention_forward.1} parent=11 // pred_fallthru
          _
        // Predicated region
        $region29: #{attention_forward.1} parent=11 // pred_check
          %p199 = pneg %p146
        $region30: #{attention_forward.1} parent=11 // pred_check_branch
          %201 = sbr.rel (%p199) target = $region32
        $region31: #{attention_forward.1} parent=11 // pred_region
          _
        $region32: #{attention_forward.1} parent=11 // pred_fallthru
          _
      $region12: #{attention_forward.1} parent=5 // pred_fallthru
        _
      %p202 = scmp.lt.s32.totalorder %s15, 2
      // Predicated region
      $region33: #{attention_forward.1} parent=5 // pred_check
        %p203 = pneg %p202
      $region34: #{attention_forward.1} parent=5 // pred_check_branch
        %205 = sbr.rel (%p203) target = $region36
      $region35: #{attention_forward.1} parent=5 // pred_region
        // Predicated region
        $region37: #{attention_forward.1} parent=35 // pred_check
          %p206 = pneg %p35
        $region38: #{attention_forward.1} parent=35 // pred_check_branch
          %208 = sbr.rel (%p206) target = $region40
        $region39: #{attention_forward.1} parent=35 // pred_region
          %p209 = scmp.lt.s32.totalorder %s15, 1
          %s210 = scalar_select %p209, %s15, 1
          %s211 = smul.addr %s210, 8
          %s212 = scalar_lea.vmem %s0, %s211
        $region40: #{attention_forward.1} parent=35 // pred_fallthru
          _
      $region36: #{attention_forward.1} parent=5 // pred_fallthru
        _
      %p213 = scmp.le.s32.totalorder 1, %s15
      %p214 = scmp.lt.s32.totalorder %s15, 3
      %p215 = pnand %p213, %p214
      %p216 = pneg %p215
      // Predicated region
      $region41: #{attention_forward.1} parent=5 // pred_check
        _
      $region42: #{attention_forward.1} parent=5 // pred_check_branch
        %218 = sbr.rel (%p215) target = $region44
      $region43: #{attention_forward.1} parent=5 // pred_region
        %s219 = ssub.s32 %s15, 1
        %p220 = scmp.lt.s32.totalorder %s20, 1
        %s221 = scalar_select %p220, %s20, 1
        %s222 = smul.addr %s221, 8
        %s223 = scalar_lea.vmem %s0, %s222
        %p224 = pneg %p41
        %p225 = pneg %p38
        %p226 = pneg %p62
        %p227 = pneg %p59
        %p228 = pneg %p83
        %p229 = pneg %p80
        %p230 = pneg %p104
        %p231 = pneg %p101
        %p232 = pneg %p125
        %p233 = pneg %p122
        %p234 = pneg %p146
        %p235 = pneg %p143
        %p236 = pneg %p172
        %p237 = pneg %p169
        %s238 = sand.u32 %s159, 1
        %s239 = scalar_lea.sflag [#allocation3], %s238
        %s240 = sand.u32 %s159, 1
        %s241 = smul.addr %s240, 8
        %s242 = scalar_lea.vmem [#allocation2], %s241
        %p243 = scmp.lt.s32.totalorder %s20, 1
        %s244 = scalar_select %p243, %s20, 1
        %s245 = smul.addr %s244, 8
        %s246 = scalar_lea.vmem %s0, %s245
        %v248 = vld [vmem:[%s1] sm:$0xf]
        %v249 = vld [vmem:[%s246] sm:$0xff]
        %vm250 = vcmask 261120
        %v251 = vsel %vm250, %v249, 0.0
        %252 = vadd.xlane.f32.xlu0 %v251
        %v253 = vpop.xlane.xlu0 %252
        %v254 = vrcp.pop 32.0
        %v255 = vmul.f32 %v253, %v254
        %v256 = vsub.f32 %v249, %v255
        %v257 = vmul.f32 %v256, %v256
        %v258 = vsel %vm250, %v257, 0.0
        %259 = vadd.xlane.f32.xlu0 %v258
        %v260 = vpop.xlane.xlu0 %259
        %v261 = vmul.f32 %v260, %v254
        %v262 = vadd.f32 %v261, 1e-05
        %v263 = vrsqrt.pop %v262
        %v264 = vmul.f32 %v256, %v263
        %v265 = vlaneseq
        %v266 = vshrl.u32 %v265, 7
        %v267 = vsub.s32 0, %v266
        %v268 = vrot.slane %v248, %v267
        %v269 = vmul.f32 %v264, %v268
        %v270 = vpack.c.bf16 %v269, %v269
        %v271 = vld [vmem:[%s2] sm:$0xff]
        %v272 = vld [vmem:[%s2 + $0x8] sm:$0xff]
        %v273 = vld [vmem:[%s2 + $0x10] sm:$0xff]
        %v274 = vld [vmem:[%s2 + $0x18] sm:$0xff]
        %v279 = vunpack.c.l.b16 %v271
        %v280 = vunpack.c.h.b16 %v271
        %v281 = vunpack.c.l.b16 %v272
        %v282 = vunpack.c.h.b16 %v272
        %v283 = vunpack.c.l.b16 %v273
        %v284 = vunpack.c.h.b16 %v273
        %v285 = vunpack.c.l.b16 %v274
        %v286 = vunpack.c.h.b16 %v274
        %v287 = vpack.c.b16 %v281, %v279
        %v288 = vpack.c.b16 %v282, %v280
        %v289 = vpack.c.b16 %v285, %v283
        %v290 = vpack.c.b16 %v286, %v284
        %v296 = vsel %vm250, %v270, 0
        %298 = vmatprep.subr.bf16.mxu0 %v288
        %299 = vmatpush1.bf16.msra.mxu0 %v287
        %300 = vmatprep.subr.bf16.mxu0 %v290
        %301 = vmatpush1.bf16.msra.mxu0 %v289
        %302 = vmatprep.subr.bf16.mxu0 0
        %303 = vmatpush1.bf16.msra.mxu0 0
        %304 = vmatprep.subr.bf16.mxu0 0
        %305 = vmatpush1.bf16.msra.mxu0 0
        %306 = vmatprep.subr.bf16.mxu0 0
        %307 = vmatpush1.bf16.msra.mxu0 0
        %308 = vmatprep.subr.bf16.mxu0 0
        %309 = vmatpush1.bf16.msra.mxu0 0
        %310 = vmatprep.subr.bf16.mxu0 0
        %311 = vmatpush1.bf16.msra.mxu0 0
        %312 = vmatprep.subr.bf16.mxu0 0
        %313 = vmatpush1.bf16.msra.mxu0 0
        %314 = vmatprep.subr.bf16.mxu0 0
        %315 = vmatpush1.bf16.msra.mxu0 0
        %316 = vmatprep.subr.bf16.mxu0 0
        %317 = vmatpush1.bf16.msra.mxu0 0
        %318 = vmatprep.subr.bf16.mxu0 0
        %319 = vmatpush1.bf16.msra.mxu0 0
        %320 = vmatprep.subr.bf16.mxu0 0
        %321 = vmatpush1.bf16.msra.mxu0 0
        %322 = vmatprep.subr.bf16.mxu0 0
        %323 = vmatpush1.bf16.msra.mxu0 0
        %324 = vmatprep.subr.bf16.mxu0 0
        %325 = vmatpush1.bf16.msra.mxu0 0
        %326 = vmatprep.subr.bf16.mxu0 0
        %327 = vmatpush1.bf16.msra.mxu0 0
        %328 = vmatprep.subr.bf16.mxu0 0
        %329 = vmatpush1.bf16.msra.mxu0 0
        %330 = vmatprep.mubr.bf16.mxu0 0
        %331 = vmatmul.mubr.bf16.gmra.mrb[0].mxu0 %v296
        %v332 = vpop.f32.mrb[0].mxu0
        %v333 = vadd.f32 0.0, %v332
        %v334 = vpop.f32.mrb[0].mxu0
        %v335 = vadd.f32 0.0, %v334
        %v336 = vpop.f32.mrb[0].mxu0
        %v337 = vpop.f32.mrb[0].mxu0
        %338 = vdwg.mxu0
        %340 = vrot.lane.b32.xlu0 %v333, 112
        %v341 = vpop.permute.xlu0 %340
        %343 = vrot.lane.b32.xlu0 %v333, 96
        %v344 = vpop.permute.xlu0 %343
        %346 = vrot.lane.b32.xlu0 %v333, 80
        %v347 = vpop.permute.xlu0 %346
        %v349 = vcombine.low %v333, %v344
        %v350 = vcombine.high %v333, %v344
        %v352 = vunpack.c.l.s4 1983009808
        %v353 = vunpack.c.0.s8 %v352
        %v354 = vlaneseq
        %v355 = vshrl.u32 %v354, 7
        %v356 = vsub.s32 %v353, %v355
        %v357 = vrot.slane %v349, %v356
        %v359 = vunpack.c.l.s4 1983009808
        %v360 = vunpack.c.0.s8 %v359
        %v361 = vlaneseq
        %v362 = vshrl.u32 %v361, 7
        %v363 = vsub.s32 %v360, %v362
        %v364 = vrot.slane %v350, %v363
        %v365 = vcombine.low %v341, %v347
        %v366 = vcombine.high %v341, %v347
        %v368 = vunpack.c.l.s4 1983009808
        %v369 = vunpack.c.0.s8 %v368
        %v370 = vlaneseq
        %v371 = vshrl.u32 %v370, 7
        %v372 = vsub.s32 %v369, %v371
        %v373 = vrot.slane %v365, %v372
        %v375 = vunpack.c.l.s4 1983009808
        %v376 = vunpack.c.0.s8 %v375
        %v377 = vlaneseq
        %v378 = vshrl.u32 %v377, 7
        %v379 = vsub.s32 %v376, %v378
        %v380 = vrot.slane %v366, %v379
        %v381 = vcombine.low %v357, %v373
        %v382 = vcombine.high %v357, %v373
        %v384 = vunpack.c.l.s4 1934713408
        %v385 = vunpack.c.0.s8 %v384
        %v386 = vlaneseq
        %v387 = vshrl.u32 %v386, 7
        %v388 = vsub.s32 %v385, %v387
        %v389 = vrot.slane %v381, %v388
        %v391 = vunpack.c.l.s4 1934713408
        %v392 = vunpack.c.0.s8 %v391
        %v393 = vlaneseq
        %v394 = vshrl.u32 %v393, 7
        %v395 = vsub.s32 %v392, %v394
        %v396 = vrot.slane %v382, %v395
        %v397 = vcombine.low %v364, %v380
        %v398 = vcombine.high %v364, %v380
        %v400 = vunpack.c.l.s4 1934713408
        %v401 = vunpack.c.0.s8 %v400
        %v402 = vlaneseq
        %v403 = vshrl.u32 %v402, 7
        %v404 = vsub.s32 %v401, %v403
        %v405 = vrot.slane %v397, %v404
        %v407 = vunpack.c.l.s4 1934713408
        %v408 = vunpack.c.0.s8 %v407
        %v409 = vlaneseq
        %v410 = vshrl.u32 %v409, 7
        %v411 = vsub.s32 %v408, %v410
        %v412 = vrot.slane %v398, %v411
        %v413 = vcombine.high %v389, 0.0
        %v414 = vcombine.high %v396, 0.0
        %v415 = vcombine.high %v405, 0.0
        %v416 = vcombine.high %v412, 0.0
        %v417 = vcombine.low %v389, %v396
        %v419 = vunpack.c.l.s4 1983009808
        %v420 = vunpack.c.0.s8 %v419
        %v421 = vlaneseq
        %v422 = vshrl.u32 %v421, 7
        %v423 = vsub.s32 %v420, %v422
        %v424 = vrot.slane %v417, %v423
        %v425 = vcombine.low %v413, %v414
        %v427 = vunpack.c.l.s4 1983009808
        %v428 = vunpack.c.0.s8 %v427
        %v429 = vlaneseq
        %v430 = vshrl.u32 %v429, 7
        %v431 = vsub.s32 %v428, %v430
        %v432 = vrot.slane %v425, %v431
        %v433 = vcombine.low %v405, %v412
        %v435 = vunpack.c.l.s4 1983009808
        %v436 = vunpack.c.0.s8 %v435
        %v437 = vlaneseq
        %v438 = vshrl.u32 %v437, 7
        %v439 = vsub.s32 %v436, %v438
        %v440 = vrot.slane %v433, %v439
        %v441 = vcombine.low %v415, %v416
        %v443 = vunpack.c.l.s4 1983009808
        %v444 = vunpack.c.0.s8 %v443
        %v445 = vlaneseq
        %v446 = vshrl.u32 %v445, 7
        %v447 = vsub.s32 %v444, %v446
        %v448 = vrot.slane %v441, %v447
        %v449 = vcombine.low %v424, %v432
        %v450 = vcombine.high %v424, %v432
        %v452 = vunpack.c.l.s4 1934713408
        %v453 = vunpack.c.0.s8 %v452
        %v454 = vlaneseq
        %v455 = vshrl.u32 %v454, 7
        %v456 = vsub.s32 %v453, %v455
        %v457 = vrot.slane %v449, %v456
        %v459 = vunpack.c.l.s4 1934713408
        %v460 = vunpack.c.0.s8 %v459
        %v461 = vlaneseq
        %v462 = vshrl.u32 %v461, 7
        %v463 = vsub.s32 %v460, %v462
        %v464 = vrot.slane %v450, %v463
        %v465 = vcombine.low %v440, %v448
        %v466 = vcombine.high %v440, %v448
        %v468 = vunpack.c.l.s4 1934713408
        %v469 = vunpack.c.0.s8 %v468
        %v470 = vlaneseq
        %v471 = vshrl.u32 %v470, 7
        %v472 = vsub.s32 %v469, %v471
        %v473 = vrot.slane %v465, %v472
        %v475 = vunpack.c.l.s4 1934713408
        %v476 = vunpack.c.0.s8 %v475
        %v477 = vlaneseq
        %v478 = vshrl.u32 %v477, 7
        %v479 = vsub.s32 %v476, %v478
        %v480 = vrot.slane %v466, %v479
        %v481 = vcombine.low %v457, %v473
        %v482 = vcombine.high %v457, %v473
        %v483 = vcombine.low %v464, %v480
        %v484 = vcombine.high %v464, %v480
        %485 = vrot.lane.b32.xlu0 %v333, 64
        %v486 = vpop.permute.xlu0 %485
        %487 = vrot.lane.b32.xlu0 %v341, 64
        %v488 = vpop.permute.xlu0 %487
        %489 = vrot.lane.b32.xlu0 %v344, 64
        %v490 = vpop.permute.xlu0 %489
        %491 = vrot.lane.b32.xlu0 %v347, 64
        %v492 = vpop.permute.xlu0 %491
        %v497 = vcombine.low %v486, %v490
        %v498 = vcombine.high %v486, %v490
        %v500 = vunpack.c.l.s4 1983009808
        %v501 = vunpack.c.0.s8 %v500
        %v502 = vlaneseq
        %v503 = vshrl.u32 %v502, 7
        %v504 = vsub.s32 %v501, %v503
        %v505 = vrot.slane %v497, %v504
        %v507 = vunpack.c.l.s4 1983009808
        %v508 = vunpack.c.0.s8 %v507
        %v509 = vlaneseq
        %v510 = vshrl.u32 %v509, 7
        %v511 = vsub.s32 %v508, %v510
        %v512 = vrot.slane %v498, %v511
        %v513 = vcombine.low %v488, %v492
        %v514 = vcombine.high %v488, %v492
        %v516 = vunpack.c.l.s4 1983009808
        %v517 = vunpack.c.0.s8 %v516
        %v518 = vlaneseq
        %v519 = vshrl.u32 %v518, 7
        %v520 = vsub.s32 %v517, %v519
        %v521 = vrot.slane %v513, %v520
        %v523 = vunpack.c.l.s4 1983009808
        %v524 = vunpack.c.0.s8 %v523
        %v525 = vlaneseq
        %v526 = vshrl.u32 %v525, 7
        %v527 = vsub.s32 %v524, %v526
        %v528 = vrot.slane %v514, %v527
        %v529 = vcombine.low %v505, %v521
        %v530 = vcombine.high %v505, %v521
        %v532 = vunpack.c.l.s4 1934713408
        %v533 = vunpack.c.0.s8 %v532
        %v534 = vlaneseq
        %v535 = vshrl.u32 %v534, 7
        %v536 = vsub.s32 %v533, %v535
        %v537 = vrot.slane %v529, %v536
        %v539 = vunpack.c.l.s4 1934713408
        %v540 = vunpack.c.0.s8 %v539
        %v541 = vlaneseq
        %v542 = vshrl.u32 %v541, 7
        %v543 = vsub.s32 %v540, %v542
        %v544 = vrot.slane %v530, %v543
        %v545 = vcombine.low %v512, %v528
        %v546 = vcombine.high %v512, %v528
        %v548 = vunpack.c.l.s4 1934713408
        %v549 = vunpack.c.0.s8 %v548
        %v550 = vlaneseq
        %v551 = vshrl.u32 %v550, 7
        %v552 = vsub.s32 %v549, %v551
        %v553 = vrot.slane %v545, %v552
        %v555 = vunpack.c.l.s4 1934713408
        %v556 = vunpack.c.0.s8 %v555
        %v557 = vlaneseq
        %v558 = vshrl.u32 %v557, 7
        %v559 = vsub.s32 %v556, %v558
        %v560 = vrot.slane %v546, %v559
        %v561 = vcombine.high %v537, 0.0
        %v562 = vcombine.high %v544, 0.0
        %v563 = vcombine.high %v553, 0.0
        %v564 = vcombine.high %v560, 0.0
        %v565 = vcombine.low %v537, %v544
        %v567 = vunpack.c.l.s4 1983009808
        %v568 = vunpack.c.0.s8 %v567
        %v569 = vlaneseq
        %v570 = vshrl.u32 %v569, 7
        %v571 = vsub.s32 %v568, %v570
        %v572 = vrot.slane %v565, %v571
        %v573 = vcombine.low %v561, %v562
        %v575 = vunpack.c.l.s4 1983009808
        %v576 = vunpack.c.0.s8 %v575
        %v577 = vlaneseq
        %v578 = vshrl.u32 %v577, 7
        %v579 = vsub.s32 %v576, %v578
        %v580 = vrot.slane %v573, %v579
        %v581 = vcombine.low %v553, %v560
        %v583 = vunpack.c.l.s4 1983009808
        %v584 = vunpack.c.0.s8 %v583
        %v585 = vlaneseq
        %v586 = vshrl.u32 %v585, 7
        %v587 = vsub.s32 %v584, %v586
        %v588 = vrot.slane %v581, %v587
        %v589 = vcombine.low %v563, %v564
        %v591 = vunpack.c.l.s4 1983009808
        %v592 = vunpack.c.0.s8 %v591
        %v593 = vlaneseq
        %v594 = vshrl.u32 %v593, 7
        %v595 = vsub.s32 %v592, %v594
        %v596 = vrot.slane %v589, %v595
        %v597 = vcombine.low %v572, %v580
        %v598 = vcombine.high %v572, %v580
        %v600 = vunpack.c.l.s4 1934713408
        %v601 = vunpack.c.0.s8 %v600
        %v602 = vlaneseq
        %v603 = vshrl.u32 %v602, 7
        %v604 = vsub.s32 %v601, %v603
        %v605 = vrot.slane %v597, %v604
        %v607 = vunpack.c.l.s4 1934713408
        %v608 = vunpack.c.0.s8 %v607
        %v609 = vlaneseq
        %v610 = vshrl.u32 %v609, 7
        %v611 = vsub.s32 %v608, %v610
        %v612 = vrot.slane %v598, %v611
        %v613 = vcombine.low %v588, %v596
        %v614 = vcombine.high %v588, %v596
        %v616 = vunpack.c.l.s4 1934713408
        %v617 = vunpack.c.0.s8 %v616
        %v618 = vlaneseq
        %v619 = vshrl.u32 %v618, 7
        %v620 = vsub.s32 %v617, %v619
        %v621 = vrot.slane %v613, %v620
        %v623 = vunpack.c.l.s4 1934713408
        %v624 = vunpack.c.0.s8 %v623
        %v625 = vlaneseq
        %v626 = vshrl.u32 %v625, 7
        %v627 = vsub.s32 %v624, %v626
        %v628 = vrot.slane %v614, %v627
        %v629 = vcombine.low %v605, %v621
        %v630 = vcombine.high %v605, %v621
        %v631 = vcombine.low %v612, %v628
        %v632 = vcombine.high %v612, %v628
        %634 = vrot.lane.b32.xlu0 %v335, 112
        %v635 = vpop.permute.xlu0 %634
        %637 = vrot.lane.b32.xlu0 %v335, 96
        %v638 = vpop.permute.xlu0 %637
        %640 = vrot.lane.b32.xlu0 %v335, 80
        %v641 = vpop.permute.xlu0 %640
        %v643 = vcombine.low %v335, %v638
        %v644 = vcombine.high %v335, %v638
        %v646 = vunpack.c.l.s4 1983009808
        %v647 = vunpack.c.0.s8 %v646
        %v648 = vlaneseq
        %v649 = vshrl.u32 %v648, 7
        %v650 = vsub.s32 %v647, %v649
        %v651 = vrot.slane %v643, %v650
        %v653 = vunpack.c.l.s4 1983009808
        %v654 = vunpack.c.0.s8 %v653
        %v655 = vlaneseq
        %v656 = vshrl.u32 %v655, 7
        %v657 = vsub.s32 %v654, %v656
        %v658 = vrot.slane %v644, %v657
        %v659 = vcombine.low %v635, %v641
        %v660 = vcombine.high %v635, %v641
        %v662 = vunpack.c.l.s4 1983009808
        %v663 = vunpack.c.0.s8 %v662
        %v664 = vlaneseq
        %v665 = vshrl.u32 %v664, 7
        %v666 = vsub.s32 %v663, %v665
        %v667 = vrot.slane %v659, %v666
        %v669 = vunpack.c.l.s4 1983009808
        %v670 = vunpack.c.0.s8 %v669
        %v671 = vlaneseq
        %v672 = vshrl.u32 %v671, 7
        %v673 = vsub.s32 %v670, %v672
        %v674 = vrot.slane %v660, %v673
        %v675 = vcombine.low %v651, %v667
        %v676 = vcombine.high %v651, %v667
        %v678 = vunpack.c.l.s4 1934713408
        %v679 = vunpack.c.0.s8 %v678
        %v680 = vlaneseq
        %v681 = vshrl.u32 %v680, 7
        %v682 = vsub.s32 %v679, %v681
        %v683 = vrot.slane %v675, %v682
        %v685 = vunpack.c.l.s4 1934713408
        %v686 = vunpack.c.0.s8 %v685
        %v687 = vlaneseq
        %v688 = vshrl.u32 %v687, 7
        %v689 = vsub.s32 %v686, %v688
        %v690 = vrot.slane %v676, %v689
        %v691 = vcombine.low %v658, %v674
        %v692 = vcombine.high %v658, %v674
        %v694 = vunpack.c.l.s4 1934713408
        %v695 = vunpack.c.0.s8 %v694
        %v696 = vlaneseq
        %v697 = vshrl.u32 %v696, 7
        %v698 = vsub.s32 %v695, %v697
        %v699 = vrot.slane %v691, %v698
        %v701 = vunpack.c.l.s4 1934713408
        %v702 = vunpack.c.0.s8 %v701
        %v703 = vlaneseq
        %v704 = vshrl.u32 %v703, 7
        %v705 = vsub.s32 %v702, %v704
        %v706 = vrot.slane %v692, %v705
        %v707 = vcombine.high %v683, 0.0
        %v708 = vcombine.high %v690, 0.0
        %v709 = vcombine.high %v699, 0.0
        %v710 = vcombine.high %v706, 0.0
        %v711 = vcombine.low %v683, %v690
        %v713 = vunpack.c.l.s4 1983009808
        %v714 = vunpack.c.0.s8 %v713
        %v715 = vlaneseq
        %v716 = vshrl.u32 %v715, 7
        %v717 = vsub.s32 %v714, %v716
        %v718 = vrot.slane %v711, %v717
        %v719 = vcombine.low %v707, %v708
        %v721 = vunpack.c.l.s4 1983009808
        %v722 = vunpack.c.0.s8 %v721
        %v723 = vlaneseq
        %v724 = vshrl.u32 %v723, 7
        %v725 = vsub.s32 %v722, %v724
        %v726 = vrot.slane %v719, %v725
        %v727 = vcombine.low %v699, %v706
        %v729 = vunpack.c.l.s4 1983009808
        %v730 = vunpack.c.0.s8 %v729
        %v731 = vlaneseq
        %v732 = vshrl.u32 %v731, 7
        %v733 = vsub.s32 %v730, %v732
        %v734 = vrot.slane %v727, %v733
        %v735 = vcombine.low %v709, %v710
        %v737 = vunpack.c.l.s4 1983009808
        %v738 = vunpack.c.0.s8 %v737
        %v739 = vlaneseq
        %v740 = vshrl.u32 %v739, 7
        %v741 = vsub.s32 %v738, %v740
        %v742 = vrot.slane %v735, %v741
        %v743 = vcombine.low %v718, %v726
        %v744 = vcombine.high %v718, %v726
        %v746 = vunpack.c.l.s4 1934713408
        %v747 = vunpack.c.0.s8 %v746
        %v748 = vlaneseq
        %v749 = vshrl.u32 %v748, 7
        %v750 = vsub.s32 %v747, %v749
        %v751 = vrot.slane %v743, %v750
        %v753 = vunpack.c.l.s4 1934713408
        %v754 = vunpack.c.0.s8 %v753
        %v755 = vlaneseq
        %v756 = vshrl.u32 %v755, 7
        %v757 = vsub.s32 %v754, %v756
        %v758 = vrot.slane %v744, %v757
        %v759 = vcombine.low %v734, %v742
        %v760 = vcombine.high %v734, %v742
        %v762 = vunpack.c.l.s4 1934713408
        %v763 = vunpack.c.0.s8 %v762
        %v764 = vlaneseq
        %v765 = vshrl.u32 %v764, 7
        %v766 = vsub.s32 %v763, %v765
        %v767 = vrot.slane %v759, %v766
        %v769 = vunpack.c.l.s4 1934713408
        %v770 = vunpack.c.0.s8 %v769
        %v771 = vlaneseq
        %v772 = vshrl.u32 %v771, 7
        %v773 = vsub.s32 %v770, %v772
        %v774 = vrot.slane %v760, %v773
        %v775 = vcombine.low %v751, %v767
        %v776 = vcombine.high %v751, %v767
        %v777 = vcombine.low %v758, %v774
        %v778 = vcombine.high %v758, %v774
        %v779 = vmul.f32 %v481, %v481
        %v780 = vmul.f32 %v482, %v482
        %v781 = vmul.f32 %v483, %v483
        %v782 = vmul.f32 %v484, %v484
        %vm783 = vcmask 130048
        %v784 = vsel %vm783, %v779, 0.0
        %785 = vadd.xlane.f32.xlu0 %v784
        %v786 = vpop.xlane.xlu0 %785
        %v787 = vsel %vm783, %v780, 0.0
        %788 = vadd.xlane.f32.xlu0 %v787
        %v789 = vpop.xlane.xlu0 %788
        %v790 = vsel %vm783, %v781, 0.0
        %791 = vadd.xlane.f32.xlu0 %v790
        %v792 = vpop.xlane.xlu0 %791
        %v793 = vsel %vm783, %v782, 0.0
        %794 = vadd.xlane.f32.xlu0 %v793
        %v795 = vpop.xlane.xlu0 %794
        %v796 = vmax.f32 %v786, 1e-24
        %v797 = vmax.f32 %v789, 1e-24
        %v798 = vmax.f32 %v792, 1e-24
        %v799 = vmax.f32 %v795, 1e-24
        %v800 = vrsqrt.pop %v796
        %v801 = vrsqrt.pop %v797
        %v802 = vrsqrt.pop %v798
        %v803 = vrsqrt.pop %v799
        %v804 = vmul.f32 %v481, %v800
        %v805 = vmul.f32 %v482, %v801
        %v806 = vmul.f32 %v483, %v802
        %v807 = vmul.f32 %v484, %v803
        %v808 = vlaneseq
        %v809 = vshrl.u32 %v808, 7
        %v810 = vsub.s32 1, %v809
        %v811 = vrot.slane %v248, %v810
        %v812 = vmul.f32 %v804, %v811
        %v813 = vmul.f32 %v805, %v811
        %v814 = vmul.f32 %v806, %v811
        %v815 = vmul.f32 %v807, %v811
        %v816 = vpack.c.bf16 %v812, %v812
        %v817 = vpack.c.bf16 %v813, %v813
        %v818 = vpack.c.bf16 %v814, %v814
        %v819 = vpack.c.bf16 %v815, %v815
        %v820 = vmul.f32 %v629, %v629
        %v821 = vmul.f32 %v630, %v630
        %v822 = vmul.f32 %v631, %v631
        %v823 = vmul.f32 %v632, %v632
        %v824 = vsel %vm783, %v820, 0.0
        %825 = vadd.xlane.f32.xlu0 %v824
        %v826 = vpop.xlane.xlu0 %825
        %v827 = vsel %vm783, %v821, 0.0
        %828 = vadd.xlane.f32.xlu0 %v827
        %v829 = vpop.xlane.xlu0 %828
        %v830 = vsel %vm783, %v822, 0.0
        %831 = vadd.xlane.f32.xlu0 %v830
        %v832 = vpop.xlane.xlu0 %831
        %v833 = vsel %vm783, %v823, 0.0
        %834 = vadd.xlane.f32.xlu0 %v833
        %v835 = vpop.xlane.xlu0 %834
        %v836 = vmax.f32 %v826, 1e-24
        %v837 = vmax.f32 %v829, 1e-24
        %v838 = vmax.f32 %v832, 1e-24
        %v839 = vmax.f32 %v835, 1e-24
        %v840 = vrsqrt.pop %v836
        %v841 = vrsqrt.pop %v837
        %v842 = vrsqrt.pop %v838
        %v843 = vrsqrt.pop %v839
        %v844 = vmul.f32 %v629, %v840
        %v845 = vmul.f32 %v630, %v841
        %v846 = vmul.f32 %v631, %v842
        %v847 = vmul.f32 %v632, %v843
        %v848 = vlaneseq
        %v849 = vshrl.u32 %v848, 7
        %v850 = vsub.s32 2, %v849
        %v851 = vrot.slane %v248, %v850
        %v852 = vmul.f32 %v844, %v851
        %v853 = vmul.f32 %v845, %v851
        %v854 = vmul.f32 %v846, %v851
        %v855 = vmul.f32 %v847, %v851
        %v856 = vpack.c.bf16 %v852, %v852
        %v857 = vpack.c.bf16 %v853, %v853
        %v858 = vpack.c.bf16 %v854, %v854
        %v859 = vpack.c.bf16 %v855, %v855
        %v861 = vsel %vm783, %v816, 0
        %v864 = vsel %vm783, %v856, 0
        %866 = vmatprep.subr.bf16.mxu0 0
        %867 = vmatpush1.bf16.xpose.msra.mxu0 %v864
        %868 = vmatprep.subr.bf16.mxu0 0
        %869 = vmatpush1.bf16.xpose.msra.mxu0 0
        %870 = vmatprep.subr.bf16.mxu0 0
        %871 = vmatpush1.bf16.xpose.msra.mxu0 0
        %872 = vmatprep.subr.bf16.mxu0 0
        %873 = vmatpush1.bf16.xpose.msra.mxu0 0
        %874 = vmatprep.subr.bf16.mxu0 0
        %875 = vmatpush1.bf16.xpose.msra.mxu0 0
        %876 = vmatprep.subr.bf16.mxu0 0
        %877 = vmatpush1.bf16.xpose.msra.mxu0 0
        %878 = vmatprep.subr.bf16.mxu0 0
        %879 = vmatpush1.bf16.xpose.msra.mxu0 0
        %880 = vmatprep.subr.bf16.mxu0 0
        %881 = vmatpush1.bf16.xpose.msra.mxu0 0
        %882 = vmatprep.subr.bf16.mxu0 0
        %883 = vmatpush1.bf16.xpose.msra.mxu0 0
        %884 = vmatprep.subr.bf16.mxu0 0
        %885 = vmatpush1.bf16.xpose.msra.mxu0 0
        %886 = vmatprep.subr.bf16.mxu0 0
        %887 = vmatpush1.bf16.xpose.msra.mxu0 0
        %888 = vmatprep.subr.bf16.mxu0 0
        %889 = vmatpush1.bf16.xpose.msra.mxu0 0
        %890 = vmatprep.subr.bf16.mxu0 0
        %891 = vmatpush1.bf16.xpose.msra.mxu0 0
        %892 = vmatprep.subr.bf16.mxu0 0
        %893 = vmatpush1.bf16.xpose.msra.mxu0 0
        %894 = vmatprep.subr.bf16.mxu0 0
        %895 = vmatpush1.bf16.xpose.msra.mxu0 0
        %896 = vmatprep.subr.bf16.mxu0 0
        %897 = vmatpush1.bf16.xpose.msra.mxu0 0
        %898 = vmatprep.mubr.bf16.mxu0 0
        %899 = vmatmul.mubr.bf16.gmra.mrb[0].mxu0 %v861
        %v900 = vpop.f32.mrb[0].mxu0
        %v901 = vadd.f32 0.0, %v900
        %v902 = vpop.f32.mrb[0].mxu0
        %v903 = vpop.f32.mrb[0].mxu0
        %v904 = vpop.f32.mrb[0].mxu0
        %905 = vdwg.mxu0
        %v907 = vsel %vm783, %v817, 0
        %v910 = vsel %vm783, %v857, 0
        %912 = vmatprep.subr.bf16.mxu0 0
        %913 = vmatpush1.bf16.xpose.msra.mxu0 %v910
        %914 = vmatprep.subr.bf16.mxu0 0
        %915 = vmatpush1.bf16.xpose.msra.mxu0 0
        %916 = vmatprep.subr.bf16.mxu0 0
        %917 = vmatpush1.bf16.xpose.msra.mxu0 0
        %918 = vmatprep.subr.bf16.mxu0 0
        %919 = vmatpush1.bf16.xpose.msra.mxu0 0
        %920 = vmatprep.subr.bf16.mxu0 0
        %921 = vmatpush1.bf16.xpose.msra.mxu0 0
        %922 = vmatprep.subr.bf16.mxu0 0
        %923 = vmatpush1.bf16.xpose.msra.mxu0 0
        %924 = vmatprep.subr.bf16.mxu0 0
        %925 = vmatpush1.bf16.xpose.msra.mxu0 0
        %926 = vmatprep.subr.bf16.mxu0 0
        %927 = vmatpush1.bf16.xpose.msra.mxu0 0
        %928 = vmatprep.subr.bf16.mxu0 0
        %929 = vmatpush1.bf16.xpose.msra.mxu0 0
        %930 = vmatprep.subr.bf16.mxu0 0
        %931 = vmatpush1.bf16.xpose.msra.mxu0 0
        %932 = vmatprep.subr.bf16.mxu0 0
        %933 = vmatpush1.bf16.xpose.msra.mxu0 0
        %934 = vmatprep.subr.bf16.mxu0 0
        %935 = vmatpush1.bf16.xpose.msra.mxu0 0
        %936 = vmatprep.subr.bf16.mxu0 0
        %937 = vmatpush1.bf16.xpose.msra.mxu0 0
        %938 = vmatprep.subr.bf16.mxu0 0
        %939 = vmatpush1.bf16.xpose.msra.mxu0 0
        %940 = vmatprep.subr.bf16.mxu0 0
        %941 = vmatpush1.bf16.xpose.msra.mxu0 0
        %942 = vmatprep.subr.bf16.mxu0 0
        %943 = vmatpush1.bf16.xpose.msra.mxu0 0
        %944 = vmatprep.mubr.bf16.mxu0 0
        %945 = vmatmul.mubr.bf16.gmra.mrb[0].mxu0 %v907
        %v946 = vpop.f32.mrb[0].mxu0
        %v947 = vadd.f32 0.0, %v946
        %v948 = vpop.f32.mrb[0].mxu0
        %v949 = vpop.f32.mrb[0].mxu0
        %v950 = vpop.f32.mrb[0].mxu0
        %951 = vdwg.mxu0
        %v953 = vsel %vm783, %v818, 0
        %v956 = vsel %vm783, %v858, 0
        %958 = vmatprep.subr.bf16.mxu0 0
        %959 = vmatpush1.bf16.xpose.msra.mxu0 %v956
        %960 = vmatprep.subr.bf16.mxu0 0
        %961 = vmatpush1.bf16.xpose.msra.mxu0 0
        %962 = vmatprep.subr.bf16.mxu0 0
        %963 = vmatpush1.bf16.xpose.msra.mxu0 0
        %964 = vmatprep.subr.bf16.mxu0 0
        %965 = vmatpush1.bf16.xpose.msra.mxu0 0
        %966 = vmatprep.subr.bf16.mxu0 0
        %967 = vmatpush1.bf16.xpose.msra.mxu0 0
        %968 = vmatprep.subr.bf16.mxu0 0
        %969 = vmatpush1.bf16.xpose.msra.mxu0 0
        %970 = vmatprep.subr.bf16.mxu0 0
        %971 = vmatpush1.bf16.xpose.msra.mxu0 0
        %972 = vmatprep.subr.bf16.mxu0 0
        %973 = vmatpush1.bf16.xpose.msra.mxu0 0
        %974 = vmatprep.subr.bf16.mxu0 0
        %975 = vmatpush1.bf16.xpose.msra.mxu0 0
        %976 = vmatprep.subr.bf16.mxu0 0
        %977 = vmatpush1.bf16.xpose.msra.mxu0 0
        %978 = vmatprep.subr.bf16.mxu0 0
        %979 = vmatpush1.bf16.xpose.msra.mxu0 0
        %980 = vmatprep.subr.bf16.mxu0 0
        %981 = vmatpush1.bf16.xpose.msra.mxu0 0
        %982 = vmatprep.subr.bf16.mxu0 0
        %983 = vmatpush1.bf16.xpose.msra.mxu0 0
        %984 = vmatprep.subr.bf16.mxu0 0
        %985 = vmatpush1.bf16.xpose.msra.mxu0 0
        %986 = vmatprep.subr.bf16.mxu0 0
        %987 = vmatpush1.bf16.xpose.msra.mxu0 0
        %988 = vmatprep.subr.bf16.mxu0 0
        %989 = vmatpush1.bf16.xpose.msra.mxu0 0
        %990 = vmatprep.mubr.bf16.mxu0 0
        %991 = vmatmul.mubr.bf16.gmra.mrb[0].mxu0 %v953
        %v992 = vpop.f32.mrb[0].mxu0
        %v993 = vadd.f32 0.0, %v992
        %v994 = vpop.f32.mrb[0].mxu0
        %v995 = vpop.f32.mrb[0].mxu0
        %v996 = vpop.f32.mrb[0].mxu0
        %997 = vdwg.mxu0
        %v999 = vsel %vm783, %v819, 0
        %v1002 = vsel %vm783, %v859, 0
        %1004 = vmatprep.subr.bf16.mxu0 0
        %1005 = vmatpush1.bf16.xpose.msra.mxu0 %v1002
        %1006 = vmatprep.subr.bf16.mxu0 0
        %1007 = vmatpush1.bf16.xpose.msra.mxu0 0
        %1008 = vmatprep.subr.bf16.mxu0 0
        %1009 = vmatpush1.bf16.xpose.msra.mxu0 0
        %1010 = vmatprep.subr.bf16.mxu0 0
        %1011 = vmatpush1.bf16.xpose.msra.mxu0 0
        %1012 = vmatprep.subr.bf16.mxu0 0
        %1013 = vmatpush1.bf16.xpose.msra.mxu0 0
        %1014 = vmatprep.subr.bf16.mxu0 0
        %1015 = vmatpush1.bf16.xpose.msra.mxu0 0
        %1016 = vmatprep.subr.bf16.mxu0 0
        %1017 = vmatpush1.bf16.xpose.msra.mxu0 0
        %1018 = vmatprep.subr.bf16.mxu0 0
        %1019 = vmatpush1.bf16.xpose.msra.mxu0 0
        %1020 = vmatprep.subr.bf16.mxu0 0
        %1021 = vmatpush1.bf16.xpose.msra.mxu0 0
        %1022 = vmatprep.subr.bf16.mxu0 0
        %1023 = vmatpush1.bf16.xpose.msra.mxu0 0
        %1024 = vmatprep.subr.bf16.mxu0 0
        %1025 = vmatpush1.bf16.xpose.msra.mxu0 0
        %1026 = vmatprep.subr.bf16.mxu0 0
        %1027 = vmatpush1.bf16.xpose.msra.mxu0 0
        %1028 = vmatprep.subr.bf16.mxu0 0
        %1029 = vmatpush1.bf16.xpose.msra.mxu0 0
        %1030 = vmatprep.subr.bf16.mxu0 0
        %1031 = vmatpush1.bf16.xpose.msra.mxu0 0
        %1032 = vmatprep.subr.bf16.mxu0 0
        %1033 = vmatpush1.bf16.xpose.msra.mxu0 0
        %1034 = vmatprep.subr.bf16.mxu0 0
        %1035 = vmatpush1.bf16.xpose.msra.mxu0 0
        %1036 = vmatprep.mubr.bf16.mxu0 0
        %1037 = vmatmul.mubr.bf16.gmra.mrb[0].mxu0 %v999
        %v1038 = vpop.f32.mrb[0].mxu0
        %v1039 = vadd.f32 0.0, %v1038
        %v1040 = vpop.f32.mrb[0].mxu0
        %v1041 = vpop.f32.mrb[0].mxu0
        %v1042 = vpop.f32.mrb[0].mxu0
        %1043 = vdwg.mxu0
        %v1044 = vld [vmem:[%s4] sm:$0xf]
        %v1045 = vld [vmem:[%s4 + $0x4] sm:$0xf]
        %v1046 = vld [vmem:[%s4 + $0x8] sm:$0xf]
        %v1047 = vld [vmem:[%s4 + $0xc] sm:$0xf]
        %v1048 = vlaneseq
        %v1049 = vshrl.u32 %v1048, 7
        %v1050 = vsub.s32 3, %v1049
        %v1051 = vrot.slane %v248, %v1050
        %v1053 = vsel %vm783, %v1044, 0
        %1055 = vmatprep.subr.bf16.mxu0 0
        %1056 = vmatpush1.bf16.xpose.msra.mxu0 %v1053
        %1057 = vmatprep.subr.bf16.mxu0 0
        %1058 = vmatpush1.bf16.xpose.msra.mxu0 0
        %1059 = vmatprep.subr.bf16.mxu0 0
        %1060 = vmatpush1.bf16.xpose.msra.mxu0 0
        %1061 = vmatprep.subr.bf16.mxu0 0
        %1062 = vmatpush1.bf16.xpose.msra.mxu0 0
        %1063 = vmatprep.subr.bf16.mxu0 0
        %1064 = vmatpush1.bf16.xpose.msra.mxu0 0
        %1065 = vmatprep.subr.bf16.mxu0 0
        %1066 = vmatpush1.bf16.xpose.msra.mxu0 0
        %1067 = vmatprep.subr.bf16.mxu0 0
        %1068 = vmatpush1.bf16.xpose.msra.mxu0 0
        %1069 = vmatprep.subr.bf16.mxu0 0
        %1070 = vmatpush1.bf16.xpose.msra.mxu0 0
        %1071 = vmatprep.subr.bf16.mxu0 0
        %1072 = vmatpush1.bf16.xpose.msra.mxu0 0
        %1073 = vmatprep.subr.bf16.mxu0 0
        %1074 = vmatpush1.bf16.xpose.msra.mxu0 0
        %1075 = vmatprep.subr.bf16.mxu0 0
        %1076 = vmatpush1.bf16.xpose.msra.mxu0 0
        %1077 = vmatprep.subr.bf16.mxu0 0
        %1078 = vmatpush1.bf16.xpose.msra.mxu0 0
        %1079 = vmatprep.subr.bf16.mxu0 0
        %1080 = vmatpush1.bf16.xpose.msra.mxu0 0
        %1081 = vmatprep.subr.bf16.mxu0 0
        %1082 = vmatpush1.bf16.xpose.msra.mxu0 0
        %1083 = vmatprep.subr.bf16.mxu0 0
        %1084 = vmatpush1.bf16.xpose.msra.mxu0 0
        %1085 = vmatprep.subr.bf16.mxu0 0
        %1086 = vmatpush1.bf16.xpose.msra.mxu0 0
        %1087 = vmatprep.mubr.bf16.mxu0 0
        %1088 = vmatmul.mubr.bf16.gmra.mrb[0].mxu0 %v861
        %v1089 = vpop.f32.mrb[0].mxu0
        %v1090 = vadd.f32 %v1051, %v1089
        %v1091 = vpop.f32.mrb[0].mxu0
        %v1092 = vpop.f32.mrb[0].mxu0
        %v1093 = vpop.f32.mrb[0].mxu0
        %1094 = vdwg.mxu0
        %v1096 = vsel %vm783, %v1045, 0
        %1098 = vmatprep.subr.bf16.mxu0 0
        %1099 = vmatpush1.bf16.xpose.msra.mxu0 %v1096
        %1100 = vmatprep.subr.bf16.mxu0 0
        %1101 = vmatpush1.bf16.xpose.msra.mxu0 0
        %1102 = vmatprep.subr.bf16.mxu0 0
        %1103 = vmatpush1.bf16.xpose.msra.mxu0 0
        %1104 = vmatprep.subr.bf16.mxu0 0
        %1105 = vmatpush1.bf16.xpose.msra.mxu0 0
        %1106 = vmatprep.subr.bf16.mxu0 0
        %1107 = vmatpush1.bf16.xpose.msra.mxu0 0
        %1108 = vmatprep.subr.bf16.mxu0 0
        %1109 = vmatpush1.bf16.xpose.msra.mxu0 0
        %1110 = vmatprep.subr.bf16.mxu0 0
        %1111 = vmatpush1.bf16.xpose.msra.mxu0 0
        %1112 = vmatprep.subr.bf16.mxu0 0
        %1113 = vmatpush1.bf16.xpose.msra.mxu0 0
        %1114 = vmatprep.subr.bf16.mxu0 0
        %1115 = vmatpush1.bf16.xpose.msra.mxu0 0
        %1116 = vmatprep.subr.bf16.mxu0 0
        %1117 = vmatpush1.bf16.xpose.msra.mxu0 0
        %1118 = vmatprep.subr.bf16.mxu0 0
        %1119 = vmatpush1.bf16.xpose.msra.mxu0 0
        %1120 = vmatprep.subr.bf16.mxu0 0
        %1121 = vmatpush1.bf16.xpose.msra.mxu0 0
        %1122 = vmatprep.subr.bf16.mxu0 0
        %1123 = vmatpush1.bf16.xpose.msra.mxu0 0
        %1124 = vmatprep.subr.bf16.mxu0 0
        %1125 = vmatpush1.bf16.xpose.msra.mxu0 0
        %1126 = vmatprep.subr.bf16.mxu0 0
        %1127 = vmatpush1.bf16.xpose.msra.mxu0 0
        %1128 = vmatprep.subr.bf16.mxu0 0
        %1129 = vmatpush1.bf16.xpose.msra.mxu0 0
        %1130 = vmatprep.mubr.bf16.mxu0 0
        %1131 = vmatmul.mubr.bf16.gmra.mrb[0].mxu0 %v907
        %v1132 = vpop.f32.mrb[0].mxu0
        %v1133 = vadd.f32 %v1051, %v1132
        %v1134 = vpop.f32.mrb[0].mxu0
        %v1135 = vpop.f32.mrb[0].mxu0
        %v1136 = vpop.f32.mrb[0].mxu0
        %1137 = vdwg.mxu0
        %v1139 = vsel %vm783, %v1046, 0
        %1141 = vmatprep.subr.bf16.mxu0 0
        %1142 = vmatpush1.bf16.xpose.msra.mxu0 %v1139
        %1143 = vmatprep.subr.bf16.mxu0 0
        %1144 = vmatpush1.bf16.xpose.msra.mxu0 0
        %1145 = vmatprep.subr.bf16.mxu0 0
        %1146 = vmatpush1.bf16.xpose.msra.mxu0 0
        %1147 = vmatprep.subr.bf16.mxu0 0
        %1148 = vmatpush1.bf16.xpose.msra.mxu0 0
        %1149 = vmatprep.subr.bf16.mxu0 0
        %1150 = vmatpush1.bf16.xpose.msra.mxu0 0
        %1151 = vmatprep.subr.bf16.mxu0 0
        %1152 = vmatpush1.bf16.xpose.msra.mxu0 0
        %1153 = vmatprep.subr.bf16.mxu0 0
        %1154 = vmatpush1.bf16.xpose.msra.mxu0 0
        %1155 = vmatprep.subr.bf16.mxu0 0
        %1156 = vmatpush1.bf16.xpose.msra.mxu0 0
        %1157 = vmatprep.subr.bf16.mxu0 0
        %1158 = vmatpush1.bf16.xpose.msra.mxu0 0
        %1159 = vmatprep.subr.bf16.mxu0 0
        %1160 = vmatpush1.bf16.xpose.msra.mxu0 0
        %1161 = vmatprep.subr.bf16.mxu0 0
        %1162 = vmatpush1.bf16.xpose.msra.mxu0 0
        %1163 = vmatprep.subr.bf16.mxu0 0
        %1164 = vmatpush1.bf16.xpose.msra.mxu0 0
        %1165 = vmatprep.subr.bf16.mxu0 0
        %1166 = vmatpush1.bf16.xpose.msra.mxu0 0
        %1167 = vmatprep.subr.bf16.mxu0 0
        %1168 = vmatpush1.bf16.xpose.msra.mxu0 0
        %1169 = vmatprep.subr.bf16.mxu0 0
        %1170 = vmatpush1.bf16.xpose.msra.mxu0 0
        %1171 = vmatprep.subr.bf16.mxu0 0
        %1172 = vmatpush1.bf16.xpose.msra.mxu0 0
        %1173 = vmatprep.mubr.bf16.mxu0 0
        %1174 = vmatmul.mubr.bf16.gmra.mrb[0].mxu0 %v953
        %v1175 = vpop.f32.mrb[0].mxu0
        %v1176 = vadd.f32 %v1051, %v1175
        %v1177 = vpop.f32.mrb[0].mxu0
        %v1178 = vpop.f32.mrb[0].mxu0
        %v1179 = vpop.f32.mrb[0].mxu0
        %1180 = vdwg.mxu0
        %v1182 = vsel %vm783, %v1047, 0
        %1184 = vmatprep.subr.bf16.mxu0 0
        %1185 = vmatpush1.bf16.xpose.msra.mxu0 %v1182
        %1186 = vmatprep.subr.bf16.mxu0 0
        %1187 = vmatpush1.bf16.xpose.msra.mxu0 0
        %1188 = vmatprep.subr.bf16.mxu0 0
        %1189 = vmatpush1.bf16.xpose.msra.mxu0 0
        %1190 = vmatprep.subr.bf16.mxu0 0
        %1191 = vmatpush1.bf16.xpose.msra.mxu0 0
        %1192 = vmatprep.subr.bf16.mxu0 0
        %1193 = vmatpush1.bf16.xpose.msra.mxu0 0
        %1194 = vmatprep.subr.bf16.mxu0 0
        %1195 = vmatpush1.bf16.xpose.msra.mxu0 0
        %1196 = vmatprep.subr.bf16.mxu0 0
        %1197 = vmatpush1.bf16.xpose.msra.mxu0 0
        %1198 = vmatprep.subr.bf16.mxu0 0
        %1199 = vmatpush1.bf16.xpose.msra.mxu0 0
        %1200 = vmatprep.subr.bf16.mxu0 0
        %1201 = vmatpush1.bf16.xpose.msra.mxu0 0
        %1202 = vmatprep.subr.bf16.mxu0 0
        %1203 = vmatpush1.bf16.xpose.msra.mxu0 0
        %1204 = vmatprep.subr.bf16.mxu0 0
        %1205 = vmatpush1.bf16.xpose.msra.mxu0 0
        %1206 = vmatprep.subr.bf16.mxu0 0
        %1207 = vmatpush1.bf16.xpose.msra.mxu0 0
        %1208 = vmatprep.subr.bf16.mxu0 0
        %1209 = vmatpush1.bf16.xpose.msra.mxu0 0
        %1210 = vmatprep.subr.bf16.mxu0 0
        %1211 = vmatpush1.bf16.xpose.msra.mxu0 0
        %1212 = vmatprep.subr.bf16.mxu0 0
        %1213 = vmatpush1.bf16.xpose.msra.mxu0 0
        %1214 = vmatprep.subr.bf16.mxu0 0
        %1215 = vmatpush1.bf16.xpose.msra.mxu0 0
        %1216 = vmatprep.mubr.bf16.mxu0 0
        %1217 = vmatmul.mubr.bf16.gmra.mrb[0].mxu0 %v999
        %v1218 = vpop.f32.mrb[0].mxu0
        %v1219 = vadd.f32 %v1051, %v1218
        %v1220 = vpop.f32.mrb[0].mxu0
        %v1221 = vpop.f32.mrb[0].mxu0
        %v1222 = vpop.f32.mrb[0].mxu0
        %1223 = vdwg.mxu0
        %vm1224 = vcmask 64512
        %v1225 = vsel %vm1224, %v901, -inf
        %1226 = vmax.xlane.f32.xlu0 %v1225
        %v1227 = vpop.xlane.xlu0 %1226
        %v1228 = vsel %vm1224, %v947, -inf
        %1229 = vmax.xlane.f32.xlu0 %v1228
        %v1230 = vpop.xlane.xlu0 %1229
        %v1231 = vsel %vm1224, %v993, -inf
        %1232 = vmax.xlane.f32.xlu0 %v1231
        %v1233 = vpop.xlane.xlu0 %1232
        %v1234 = vsel %vm1224, %v1039, -inf
        %1235 = vmax.xlane.f32.xlu0 %v1234
        %v1236 = vpop.xlane.xlu0 %1235
        %v1237 = vsel %vm1224, %v1090, -inf
        %1238 = vmax.xlane.f32.xlu0 %v1237
        %v1239 = vpop.xlane.xlu0 %1238
        %v1240 = vsel %vm1224, %v1133, -inf
        %1241 = vmax.xlane.f32.xlu0 %v1240
        %v1242 = vpop.xlane.xlu0 %1241
        %v1243 = vsel %vm1224, %v1176, -inf
        %1244 = vmax.xlane.f32.xlu0 %v1243
        %v1245 = vpop.xlane.xlu0 %1244
        %v1246 = vsel %vm1224, %v1219, -inf
        %1247 = vmax.xlane.f32.xlu0 %v1246
        %v1248 = vpop.xlane.xlu0 %1247
        %v1249 = vmax.f32 %v1227, %v1239
        %v1250 = vmax.f32 %v1230, %v1242
        %v1251 = vmax.f32 %v1233, %v1245
        %v1252 = vmax.f32 %v1236, %v1248
        %v1253 = vsub.f32 %v901, %v1249
        %v1254 = vsub.f32 %v947, %v1250
        %v1255 = vsub.f32 %v993, %v1251
        %v1256 = vsub.f32 %v1039, %v1252
        %v1257 = vmul.f32 %v1253, 1.442695
        %v1258 = vpow.pop %v1257
        %v1259 = vmul.f32 %v1254, 1.442695
        %v1260 = vpow.pop %v1259
        %v1261 = vmul.f32 %v1255, 1.442695
        %v1262 = vpow.pop %v1261
        %v1263 = vmul.f32 %v1256, 1.442695
        %v1264 = vpow.pop %v1263
        %v1265 = vsub.f32 %v1090, %v1249
        %v1266 = vsub.f32 %v1133, %v1250
        %v1267 = vsub.f32 %v1176, %v1251
        %v1268 = vsub.f32 %v1219, %v1252
        %v1269 = vmul.f32 %v1265, 1.442695
        %v1270 = vpow.pop %v1269
        %v1271 = vmul.f32 %v1266, 1.442695
        %v1272 = vpow.pop %v1271
        %v1273 = vmul.f32 %v1267, 1.442695
        %v1274 = vpow.pop %v1273
        %v1275 = vmul.f32 %v1268, 1.442695
        %v1276 = vpow.pop %v1275
        %v1277 = vsel %vm1224, %v1258, 0.0
        %1278 = vadd.xlane.f32.xlu0 %v1277
        %v1279 = vpop.xlane.xlu0 %1278
        %v1280 = vsel %vm1224, %v1260, 0.0
        %1281 = vadd.xlane.f32.xlu0 %v1280
        %v1282 = vpop.xlane.xlu0 %1281
        %v1283 = vsel %vm1224, %v1262, 0.0
        %1284 = vadd.xlane.f32.xlu0 %v1283
        %v1285 = vpop.xlane.xlu0 %1284
        %v1286 = vsel %vm1224, %v1264, 0.0
        %1287 = vadd.xlane.f32.xlu0 %v1286
        %v1288 = vpop.xlane.xlu0 %1287
        %v1289 = vsel %vm1224, %v1270, 0.0
        %1290 = vadd.xlane.f32.xlu0 %v1289
        %v1291 = vpop.xlane.xlu0 %1290
        %v1292 = vsel %vm1224, %v1272, 0.0
        %1293 = vadd.xlane.f32.xlu0 %v1292
        %v1294 = vpop.xlane.xlu0 %1293
        %v1295 = vsel %vm1224, %v1274, 0.0
        %1296 = vadd.xlane.f32.xlu0 %v1295
        %v1297 = vpop.xlane.xlu0 %1296
        %v1298 = vsel %vm1224, %v1276, 0.0
        %1299 = vadd.xlane.f32.xlu0 %v1298
        %v1300 = vpop.xlane.xlu0 %1299
        %v1301 = vadd.f32 %v1279, %v1291
        %v1302 = vadd.f32 %v1282, %v1294
        %v1303 = vadd.f32 %v1285, %v1297
        %v1304 = vadd.f32 %v1288, %v1300
        %v1305 = vpack.c.bf16 %v1258, %v1258
        %v1306 = vpack.c.bf16 %v1260, %v1260
        %v1307 = vpack.c.bf16 %v1262, %v1262
        %v1308 = vpack.c.bf16 %v1264, %v1264
        %v1309 = vpack.c.bf16 %v775, %v775
        %v1310 = vpack.c.bf16 %v776, %v776
        %v1311 = vpack.c.bf16 %v777, %v777
        %v1312 = vpack.c.bf16 %v778, %v778
        %v1313 = vpack.c.bf16 %v1270, %v1270
        %v1314 = vpack.c.bf16 %v1272, %v1272
        %v1315 = vpack.c.bf16 %v1274, %v1274
        %v1316 = vpack.c.bf16 %v1276, %v1276
        %v1317 = vld [vmem:[%s5] sm:$0xf]
        %v1318 = vld [vmem:[%s5 + $0x4] sm:$0xf]
        %v1319 = vld [vmem:[%s5 + $0x8] sm:$0xf]
        %v1320 = vld [vmem:[%s5 + $0xc] sm:$0xf]
        %v1322 = vsel %vm1224, %v1313, 0
        %vm1324 = vcmask 1043456
        %v1326 = vsel %vm1324, %v1317, 0
        %1328 = vmatprep.subr.bf16.mxu0 0
        %1329 = vmatpush1.bf16.msra.mxu0 %v1326
        %1330 = vmatprep.subr.bf16.mxu0 0
        %1331 = vmatpush1.bf16.msra.mxu0 0
        %1332 = vmatprep.subr.bf16.mxu0 0
        %1333 = vmatpush1.bf16.msra.mxu0 0
        %1334 = vmatprep.subr.bf16.mxu0 0
        %1335 = vmatpush1.bf16.msra.mxu0 0
        %1336 = vmatprep.subr.bf16.mxu0 0
        %1337 = vmatpush1.bf16.msra.mxu0 0
        %1338 = vmatprep.subr.bf16.mxu0 0
        %1339 = vmatpush1.bf16.msra.mxu0 0
        %1340 = vmatprep.subr.bf16.mxu0 0
        %1341 = vmatpush1.bf16.msra.mxu0 0
        %1342 = vmatprep.subr.bf16.mxu0 0
        %1343 = vmatpush1.bf16.msra.mxu0 0
        %1344 = vmatprep.subr.bf16.mxu0 0
        %1345 = vmatpush1.bf16.msra.mxu0 0
        %1346 = vmatprep.subr.bf16.mxu0 0
        %1347 = vmatpush1.bf16.msra.mxu0 0
        %1348 = vmatprep.subr.bf16.mxu0 0
        %1349 = vmatpush1.bf16.msra.mxu0 0
        %1350 = vmatprep.subr.bf16.mxu0 0
        %1351 = vmatpush1.bf16.msra.mxu0 0
        %1352 = vmatprep.subr.bf16.mxu0 0
        %1353 = vmatpush1.bf16.msra.mxu0 0
        %1354 = vmatprep.subr.bf16.mxu0 0
        %1355 = vmatpush1.bf16.msra.mxu0 0
        %1356 = vmatprep.subr.bf16.mxu0 0
        %1357 = vmatpush1.bf16.msra.mxu0 0
        %1358 = vmatprep.subr.bf16.mxu0 0
        %1359 = vmatpush1.bf16.msra.mxu0 0
        %1360 = vmatprep.mubr.bf16.mxu0 0
        %1361 = vmatmul.mubr.bf16.gmra.mrb[0].mxu0 %v1322
        %v1362 = vpop.f32.mrb[0].mxu0
        %v1363 = vadd.f32 0.0, %v1362
        %v1364 = vpop.f32.mrb[0].mxu0
        %v1365 = vpop.f32.mrb[0].mxu0
        %v1366 = vpop.f32.mrb[0].mxu0
        %1367 = vdwg.mxu0
        %v1369 = vsel %vm1224, %v1314, 0
        %v1372 = vsel %vm1324, %v1318, 0
        %1374 = vmatprep.subr.bf16.mxu0 0
        %1375 = vmatpush1.bf16.msra.mxu0 %v1372
        %1376 = vmatprep.subr.bf16.mxu0 0
        %1377 = vmatpush1.bf16.msra.mxu0 0
        %1378 = vmatprep.subr.bf16.mxu0 0
        %1379 = vmatpush1.bf16.msra.mxu0 0
        %1380 = vmatprep.subr.bf16.mxu0 0
        %1381 = vmatpush1.bf16.msra.mxu0 0
        %1382 = vmatprep.subr.bf16.mxu0 0
        %1383 = vmatpush1.bf16.msra.mxu0 0
        %1384 = vmatprep.subr.bf16.mxu0 0
        %1385 = vmatpush1.bf16.msra.mxu0 0
        %1386 = vmatprep.subr.bf16.mxu0 0
        %1387 = vmatpush1.bf16.msra.mxu0 0
        %1388 = vmatprep.subr.bf16.mxu0 0
        %1389 = vmatpush1.bf16.msra.mxu0 0
        %1390 = vmatprep.subr.bf16.mxu0 0
        %1391 = vmatpush1.bf16.msra.mxu0 0
        %1392 = vmatprep.subr.bf16.mxu0 0
        %1393 = vmatpush1.bf16.msra.mxu0 0
        %1394 = vmatprep.subr.bf16.mxu0 0
        %1395 = vmatpush1.bf16.msra.mxu0 0
        %1396 = vmatprep.subr.bf16.mxu0 0
        %1397 = vmatpush1.bf16.msra.mxu0 0
        %1398 = vmatprep.subr.bf16.mxu0 0
        %1399 = vmatpush1.bf16.msra.mxu0 0
        %1400 = vmatprep.subr.bf16.mxu0 0
        %1401 = vmatpush1.bf16.msra.mxu0 0
        %1402 = vmatprep.subr.bf16.mxu0 0
        %1403 = vmatpush1.bf16.msra.mxu0 0
        %1404 = vmatprep.subr.bf16.mxu0 0
        %1405 = vmatpush1.bf16.msra.mxu0 0
        %1406 = vmatprep.mubr.bf16.mxu0 0
        %1407 = vmatmul.mubr.bf16.gmra.mrb[0].mxu0 %v1369
        %v1408 = vpop.f32.mrb[0].mxu0
        %v1409 = vadd.f32 0.0, %v1408
        %v1410 = vpop.f32.mrb[0].mxu0
        %v1411 = vpop.f32.mrb[0].mxu0
        %v1412 = vpop.f32.mrb[0].mxu0
        %1413 = vdwg.mxu0
        %v1415 = vsel %vm1224, %v1315, 0
        %v1418 = vsel %vm1324, %v1319, 0
        %1420 = vmatprep.subr.bf16.mxu0 0
        %1421 = vmatpush1.bf16.msra.mxu0 %v1418
        %1422 = vmatprep.subr.bf16.mxu0 0
        %1423 = vmatpush1.bf16.msra.mxu0 0
        %1424 = vmatprep.subr.bf16.mxu0 0
        %1425 = vmatpush1.bf16.msra.mxu0 0
        %1426 = vmatprep.subr.bf16.mxu0 0
        %1427 = vmatpush1.bf16.msra.mxu0 0
        %1428 = vmatprep.subr.bf16.mxu0 0
        %1429 = vmatpush1.bf16.msra.mxu0 0
        %1430 = vmatprep.subr.bf16.mxu0 0
        %1431 = vmatpush1.bf16.msra.mxu0 0
        %1432 = vmatprep.subr.bf16.mxu0 0
        %1433 = vmatpush1.bf16.msra.mxu0 0
        %1434 = vmatprep.subr.bf16.mxu0 0
        %1435 = vmatpush1.bf16.msra.mxu0 0
        %1436 = vmatprep.subr.bf16.mxu0 0
        %1437 = vmatpush1.bf16.msra.mxu0 0
        %1438 = vmatprep.subr.bf16.mxu0 0
        %1439 = vmatpush1.bf16.msra.mxu0 0
        %1440 = vmatprep.subr.bf16.mxu0 0
        %1441 = vmatpush1.bf16.msra.mxu0 0
        %1442 = vmatprep.subr.bf16.mxu0 0
        %1443 = vmatpush1.bf16.msra.mxu0 0
        %1444 = vmatprep.subr.bf16.mxu0 0
        %1445 = vmatpush1.bf16.msra.mxu0 0
        %1446 = vmatprep.subr.bf16.mxu0 0
        %1447 = vmatpush1.bf16.msra.mxu0 0
        %1448 = vmatprep.subr.bf16.mxu0 0
        %1449 = vmatpush1.bf16.msra.mxu0 0
        %1450 = vmatprep.subr.bf16.mxu0 0
        %1451 = vmatpush1.bf16.msra.mxu0 0
        %1452 = vmatprep.mubr.bf16.mxu0 0
        %1453 = vmatmul.mubr.bf16.gmra.mrb[0].mxu0 %v1415
        %v1454 = vpop.f32.mrb[0].mxu0
        %v1455 = vadd.f32 0.0, %v1454
        %v1456 = vpop.f32.mrb[0].mxu0
        %v1457 = vpop.f32.mrb[0].mxu0
        %v1458 = vpop.f32.mrb[0].mxu0
        %1459 = vdwg.mxu0
        %v1461 = vsel %vm1224, %v1316, 0
        %v1464 = vsel %vm1324, %v1320, 0
        %1466 = vmatprep.subr.bf16.mxu0 0
        %1467 = vmatpush1.bf16.msra.mxu0 %v1464
        %1468 = vmatprep.subr.bf16.mxu0 0
        %1469 = vmatpush1.bf16.msra.mxu0 0
        %1470 = vmatprep.subr.bf16.mxu0 0
        %1471 = vmatpush1.bf16.msra.mxu0 0
        %1472 = vmatprep.subr.bf16.mxu0 0
        %1473 = vmatpush1.bf16.msra.mxu0 0
        %1474 = vmatprep.subr.bf16.mxu0 0
        %1475 = vmatpush1.bf16.msra.mxu0 0
        %1476 = vmatprep.subr.bf16.mxu0 0
        %1477 = vmatpush1.bf16.msra.mxu0 0
        %1478 = vmatprep.subr.bf16.mxu0 0
        %1479 = vmatpush1.bf16.msra.mxu0 0
        %1480 = vmatprep.subr.bf16.mxu0 0
        %1481 = vmatpush1.bf16.msra.mxu0 0
        %1482 = vmatprep.subr.bf16.mxu0 0
        %1483 = vmatpush1.bf16.msra.mxu0 0
        %1484 = vmatprep.subr.bf16.mxu0 0
        %1485 = vmatpush1.bf16.msra.mxu0 0
        %1486 = vmatprep.subr.bf16.mxu0 0
        %1487 = vmatpush1.bf16.msra.mxu0 0
        %1488 = vmatprep.subr.bf16.mxu0 0
        %1489 = vmatpush1.bf16.msra.mxu0 0
        %1490 = vmatprep.subr.bf16.mxu0 0
        %1491 = vmatpush1.bf16.msra.mxu0 0
        %1492 = vmatprep.subr.bf16.mxu0 0
        %1493 = vmatpush1.bf16.msra.mxu0 0
        %1494 = vmatprep.subr.bf16.mxu0 0
        %1495 = vmatpush1.bf16.msra.mxu0 0
        %1496 = vmatprep.subr.bf16.mxu0 0
        %1497 = vmatpush1.bf16.msra.mxu0 0
        %1498 = vmatprep.mubr.bf16.mxu0 0
        %1499 = vmatmul.mubr.bf16.gmra.mrb[0].mxu0 %v1461
        %v1500 = vpop.f32.mrb[0].mxu0
        %v1501 = vadd.f32 0.0, %v1500
        %v1502 = vpop.f32.mrb[0].mxu0
        %v1503 = vpop.f32.mrb[0].mxu0
        %v1504 = vpop.f32.mrb[0].mxu0
        %1505 = vdwg.mxu0
        %v1507 = vsel %vm1224, %v1305, 0
        %v1510 = vsel %vm1324, %v1309, 0
        %1512 = vmatprep.subr.bf16.mxu0 0
        %1513 = vmatpush1.bf16.msra.mxu0 %v1510
        %1514 = vmatprep.subr.bf16.mxu0 0
        %1515 = vmatpush1.bf16.msra.mxu0 0
        %1516 = vmatprep.subr.bf16.mxu0 0
        %1517 = vmatpush1.bf16.msra.mxu0 0
        %1518 = vmatprep.subr.bf16.mxu0 0
        %1519 = vmatpush1.bf16.msra.mxu0 0
        %1520 = vmatprep.subr.bf16.mxu0 0
        %1521 = vmatpush1.bf16.msra.mxu0 0
        %1522 = vmatprep.subr.bf16.mxu0 0
        %1523 = vmatpush1.bf16.msra.mxu0 0
        %1524 = vmatprep.subr.bf16.mxu0 0
        %1525 = vmatpush1.bf16.msra.mxu0 0
        %1526 = vmatprep.subr.bf16.mxu0 0
        %1527 = vmatpush1.bf16.msra.mxu0 0
        %1528 = vmatprep.subr.bf16.mxu0 0
        %1529 = vmatpush1.bf16.msra.mxu0 0
        %1530 = vmatprep.subr.bf16.mxu0 0
        %1531 = vmatpush1.bf16.msra.mxu0 0
        %1532 = vmatprep.subr.bf16.mxu0 0
        %1533 = vmatpush1.bf16.msra.mxu0 0
        %1534 = vmatprep.subr.bf16.mxu0 0
        %1535 = vmatpush1.bf16.msra.mxu0 0
        %1536 = vmatprep.subr.bf16.mxu0 0
        %1537 = vmatpush1.bf16.msra.mxu0 0
        %1538 = vmatprep.subr.bf16.mxu0 0
        %1539 = vmatpush1.bf16.msra.mxu0 0
        %1540 = vmatprep.subr.bf16.mxu0 0
        %1541 = vmatpush1.bf16.msra.mxu0 0
        %1542 = vmatprep.subr.bf16.mxu0 0
        %1543 = vmatpush1.bf16.msra.mxu0 0
        %1544 = vmatprep.mubr.bf16.mxu0 0
        %1545 = vmatmul.mubr.bf16.gmra.mrb[0].mxu0 %v1507
        %v1546 = vpop.f32.mrb[0].mxu0
        %v1547 = vadd.f32 %v1363, %v1546
        %v1548 = vpop.f32.mrb[0].mxu0
        %v1549 = vpop.f32.mrb[0].mxu0
        %v1550 = vpop.f32.mrb[0].mxu0
        %1551 = vdwg.mxu0
        %v1553 = vsel %vm1224, %v1306, 0
        %v1556 = vsel %vm1324, %v1310, 0
        %1558 = vmatprep.subr.bf16.mxu0 0
        %1559 = vmatpush1.bf16.msra.mxu0 %v1556
        %1560 = vmatprep.subr.bf16.mxu0 0
        %1561 = vmatpush1.bf16.msra.mxu0 0
        %1562 = vmatprep.subr.bf16.mxu0 0
        %1563 = vmatpush1.bf16.msra.mxu0 0
        %1564 = vmatprep.subr.bf16.mxu0 0
        %1565 = vmatpush1.bf16.msra.mxu0 0
        %1566 = vmatprep.subr.bf16.mxu0 0
        %1567 = vmatpush1.bf16.msra.mxu0 0
        %1568 = vmatprep.subr.bf16.mxu0 0
        %1569 = vmatpush1.bf16.msra.mxu0 0
        %1570 = vmatprep.subr.bf16.mxu0 0
        %1571 = vmatpush1.bf16.msra.mxu0 0
        %1572 = vmatprep.subr.bf16.mxu0 0
        %1573 = vmatpush1.bf16.msra.mxu0 0
        %1574 = vmatprep.subr.bf16.mxu0 0
        %1575 = vmatpush1.bf16.msra.mxu0 0
        %1576 = vmatprep.subr.bf16.mxu0 0
        %1577 = vmatpush1.bf16.msra.mxu0 0
        %1578 = vmatprep.subr.bf16.mxu0 0
        %1579 = vmatpush1.bf16.msra.mxu0 0
        %1580 = vmatprep.subr.bf16.mxu0 0
        %1581 = vmatpush1.bf16.msra.mxu0 0
        %1582 = vmatprep.subr.bf16.mxu0 0
        %1583 = vmatpush1.bf16.msra.mxu0 0
        %1584 = vmatprep.subr.bf16.mxu0 0
        %1585 = vmatpush1.bf16.msra.mxu0 0
        %1586 = vmatprep.subr.bf16.mxu0 0
        %1587 = vmatpush1.bf16.msra.mxu0 0
        %1588 = vmatprep.subr.bf16.mxu0 0
        %1589 = vmatpush1.bf16.msra.mxu0 0
        %1590 = vmatprep.mubr.bf16.mxu0 0
        %1591 = vmatmul.mubr.bf16.gmra.mrb[0].mxu0 %v1553
        %v1592 = vpop.f32.mrb[0].mxu0
        %v1593 = vadd.f32 %v1409, %v1592
        %v1594 = vpop.f32.mrb[0].mxu0
        %v1595 = vpop.f32.mrb[0].mxu0
        %v1596 = vpop.f32.mrb[0].mxu0
        %1597 = vdwg.mxu0
        %v1599 = vsel %vm1224, %v1307, 0
        %v1602 = vsel %vm1324, %v1311, 0
        %1604 = vmatprep.subr.bf16.mxu0 0
        %1605 = vmatpush1.bf16.msra.mxu0 %v1602
        %1606 = vmatprep.subr.bf16.mxu0 0
        %1607 = vmatpush1.bf16.msra.mxu0 0
        %1608 = vmatprep.subr.bf16.mxu0 0
        %1609 = vmatpush1.bf16.msra.mxu0 0
        %1610 = vmatprep.subr.bf16.mxu0 0
        %1611 = vmatpush1.bf16.msra.mxu0 0
        %1612 = vmatprep.subr.bf16.mxu0 0
        %1613 = vmatpush1.bf16.msra.mxu0 0
        %1614 = vmatprep.subr.bf16.mxu0 0
        %1615 = vmatpush1.bf16.msra.mxu0 0
        %1616 = vmatprep.subr.bf16.mxu0 0
        %1617 = vmatpush1.bf16.msra.mxu0 0
        %1618 = vmatprep.subr.bf16.mxu0 0
        %1619 = vmatpush1.bf16.msra.mxu0 0
        %1620 = vmatprep.subr.bf16.mxu0 0
        %1621 = vmatpush1.bf16.msra.mxu0 0
        %1622 = vmatprep.subr.bf16.mxu0 0
        %1623 = vmatpush1.bf16.msra.mxu0 0
        %1624 = vmatprep.subr.bf16.mxu0 0
        %1625 = vmatpush1.bf16.msra.mxu0 0
        %1626 = vmatprep.subr.bf16.mxu0 0
        %1627 = vmatpush1.bf16.msra.mxu0 0
        %1628 = vmatprep.subr.bf16.mxu0 0
        %1629 = vmatpush1.bf16.msra.mxu0 0
        %1630 = vmatprep.subr.bf16.mxu0 0
        %1631 = vmatpush1.bf16.msra.mxu0 0
        %1632 = vmatprep.subr.bf16.mxu0 0
        %1633 = vmatpush1.bf16.msra.mxu0 0
        %1634 = vmatprep.subr.bf16.mxu0 0
        %1635 = vmatpush1.bf16.msra.mxu0 0
        %1636 = vmatprep.mubr.bf16.mxu0 0
        %1637 = vmatmul.mubr.bf16.gmra.mrb[0].mxu0 %v1599
        %v1638 = vpop.f32.mrb[0].mxu0
        %v1639 = vadd.f32 %v1455, %v1638
        %v1640 = vpop.f32.mrb[0].mxu0
        %v1641 = vpop.f32.mrb[0].mxu0
        %v1642 = vpop.f32.mrb[0].mxu0
        %1643 = vdwg.mxu0
        %v1645 = vsel %vm1224, %v1308, 0
        %v1648 = vsel %vm1324, %v1312, 0
        %1650 = vmatprep.subr.bf16.mxu0 0
        %1651 = vmatpush1.bf16.msra.mxu0 %v1648
        %1652 = vmatprep.subr.bf16.mxu0 0
        %1653 = vmatpush1.bf16.msra.mxu0 0
        %1654 = vmatprep.subr.bf16.mxu0 0
        %1655 = vmatpush1.bf16.msra.mxu0 0
        %1656 = vmatprep.subr.bf16.mxu0 0
        %1657 = vmatpush1.bf16.msra.mxu0 0
        %1658 = vmatprep.subr.bf16.mxu0 0
        %1659 = vmatpush1.bf16.msra.mxu0 0
        %1660 = vmatprep.subr.bf16.mxu0 0
        %1661 = vmatpush1.bf16.msra.mxu0 0
        %1662 = vmatprep.subr.bf16.mxu0 0
        %1663 = vmatpush1.bf16.msra.mxu0 0
        %1664 = vmatprep.subr.bf16.mxu0 0
        %1665 = vmatpush1.bf16.msra.mxu0 0
        %1666 = vmatprep.subr.bf16.mxu0 0
        %1667 = vmatpush1.bf16.msra.mxu0 0
        %1668 = vmatprep.subr.bf16.mxu0 0
        %1669 = vmatpush1.bf16.msra.mxu0 0
        %1670 = vmatprep.subr.bf16.mxu0 0
        %1671 = vmatpush1.bf16.msra.mxu0 0
        %1672 = vmatprep.subr.bf16.mxu0 0
        %1673 = vmatpush1.bf16.msra.mxu0 0
        %1674 = vmatprep.subr.bf16.mxu0 0
        %1675 = vmatpush1.bf16.msra.mxu0 0
        %1676 = vmatprep.subr.bf16.mxu0 0
        %1677 = vmatpush1.bf16.msra.mxu0 0
        %1678 = vmatprep.subr.bf16.mxu0 0
        %1679 = vmatpush1.bf16.msra.mxu0 0
        %1680 = vmatprep.subr.bf16.mxu0 0
        %1681 = vmatpush1.bf16.msra.mxu0 0
        %1682 = vmatprep.mubr.bf16.mxu0 0
        %1683 = vmatmul.mubr.bf16.gmra.mrb[0].mxu0 %v1645
        %v1684 = vpop.f32.mrb[0].mxu0
        %v1685 = vadd.f32 %v1501, %v1684
        %v1686 = vpop.f32.mrb[0].mxu0
        %v1687 = vpop.f32.mrb[0].mxu0
        %v1688 = vpop.f32.mrb[0].mxu0
        %1689 = vdwg.mxu0
        %v1690 = vrcp.pop %v1301
        %v1691 = vmul.f32 %v1547, %v1690
        %v1692 = vrcp.pop %v1302
        %v1693 = vmul.f32 %v1593, %v1692
        %v1694 = vrcp.pop %v1303
        %v1695 = vmul.f32 %v1639, %v1694
        %v1696 = vrcp.pop %v1304
        %v1697 = vmul.f32 %v1685, %v1696
        %v1698 = vcombine.low %v1691, %v1695
        %v1699 = vcombine.high %v1691, %v1695
        %v1701 = vunpack.c.l.s4 1983009808
        %v1702 = vunpack.c.0.s8 %v1701
        %v1703 = vlaneseq
        %v1704 = vshrl.u32 %v1703, 7
        %v1705 = vsub.s32 %v1702, %v1704
        %v1706 = vrot.slane %v1698, %v1705
        %v1708 = vunpack.c.l.s4 1983009808
        %v1709 = vunpack.c.0.s8 %v1708
        %v1710 = vlaneseq
        %v1711 = vshrl.u32 %v1710, 7
        %v1712 = vsub.s32 %v1709, %v1711
        %v1713 = vrot.slane %v1699, %v1712
        %v1714 = vcombine.low %v1693, %v1697
        %v1715 = vcombine.high %v1693, %v1697
        %v1717 = vunpack.c.l.s4 1983009808
        %v1718 = vunpack.c.0.s8 %v1717
        %v1719 = vlaneseq
        %v1720 = vshrl.u32 %v1719, 7
        %v1721 = vsub.s32 %v1718, %v1720
        %v1722 = vrot.slane %v1714, %v1721
        %v1724 = vunpack.c.l.s4 1983009808
        %v1725 = vunpack.c.0.s8 %v1724
        %v1726 = vlaneseq
        %v1727 = vshrl.u32 %v1726, 7
        %v1728 = vsub.s32 %v1725, %v1727
        %v1729 = vrot.slane %v1715, %v1728
        %v1730 = vcombine.low %v1706, %v1722
        %v1731 = vcombine.high %v1706, %v1722
        %v1733 = vunpack.c.l.s4 1934713408
        %v1734 = vunpack.c.0.s8 %v1733
        %v1735 = vlaneseq
        %v1736 = vshrl.u32 %v1735, 7
        %v1737 = vsub.s32 %v1734, %v1736
        %v1738 = vrot.slane %v1730, %v1737
        %v1740 = vunpack.c.l.s4 1934713408
        %v1741 = vunpack.c.0.s8 %v1740
        %v1742 = vlaneseq
        %v1743 = vshrl.u32 %v1742, 7
        %v1744 = vsub.s32 %v1741, %v1743
        %v1745 = vrot.slane %v1731, %v1744
        %v1746 = vcombine.low %v1713, %v1729
        %v1747 = vcombine.high %v1713, %v1729
        %v1749 = vunpack.c.l.s4 1934713408
        %v1750 = vunpack.c.0.s8 %v1749
        %v1751 = vlaneseq
        %v1752 = vshrl.u32 %v1751, 7
        %v1753 = vsub.s32 %v1750, %v1752
        %v1754 = vrot.slane %v1746, %v1753
        %v1756 = vunpack.c.l.s4 1934713408
        %v1757 = vunpack.c.0.s8 %v1756
        %v1758 = vlaneseq
        %v1759 = vshrl.u32 %v1758, 7
        %v1760 = vsub.s32 %v1757, %v1759
        %v1761 = vrot.slane %v1747, %v1760
        %v1762 = vcombine.high %v1738, 0.0
        %v1763 = vcombine.high %v1745, 0.0
        %v1764 = vcombine.high %v1754, 0.0
        %v1765 = vcombine.high %v1761, 0.0
        %v1766 = vcombine.low %v1738, %v1745
        %v1768 = vunpack.c.l.s4 1983009808
        %v1769 = vunpack.c.0.s8 %v1768
        %v1770 = vlaneseq
        %v1771 = vshrl.u32 %v1770, 7
        %v1772 = vsub.s32 %v1769, %v1771
        %v1773 = vrot.slane %v1766, %v1772
        %v1774 = vcombine.low %v1762, %v1763
        %v1776 = vunpack.c.l.s4 1983009808
        %v1777 = vunpack.c.0.s8 %v1776
        %v1778 = vlaneseq
        %v1779 = vshrl.u32 %v1778, 7
        %v1780 = vsub.s32 %v1777, %v1779
        %v1781 = vrot.slane %v1774, %v1780
        %v1782 = vcombine.low %v1754, %v1761
        %v1784 = vunpack.c.l.s4 1983009808
        %v1785 = vunpack.c.0.s8 %v1784
        %v1786 = vlaneseq
        %v1787 = vshrl.u32 %v1786, 7
        %v1788 = vsub.s32 %v1785, %v1787
        %v1789 = vrot.slane %v1782, %v1788
        %v1790 = vcombine.low %v1764, %v1765
        %v1792 = vunpack.c.l.s4 1983009808
        %v1793 = vunpack.c.0.s8 %v1792
        %v1794 = vlaneseq
        %v1795 = vshrl.u32 %v1794, 7
        %v1796 = vsub.s32 %v1793, %v1795
        %v1797 = vrot.slane %v1790, %v1796
        %v1798 = vcombine.low %v1773, %v1781
        %v1799 = vcombine.high %v1773, %v1781
        %v1801 = vunpack.c.l.s4 1934713408
        %v1802 = vunpack.c.0.s8 %v1801
        %v1803 = vlaneseq
        %v1804 = vshrl.u32 %v1803, 7
        %v1805 = vsub.s32 %v1802, %v1804
        %v1806 = vrot.slane %v1798, %v1805
        %v1808 = vunpack.c.l.s4 1934713408
        %v1809 = vunpack.c.0.s8 %v1808
        %v1810 = vlaneseq
        %v1811 = vshrl.u32 %v1810, 7
        %v1812 = vsub.s32 %v1809, %v1811
        %v1813 = vrot.slane %v1799, %v1812
        %v1814 = vcombine.low %v1789, %v1797
        %v1815 = vcombine.high %v1789, %v1797
        %v1817 = vunpack.c.l.s4 1934713408
        %v1818 = vunpack.c.0.s8 %v1817
        %v1819 = vlaneseq
        %v1820 = vshrl.u32 %v1819, 7
        %v1821 = vsub.s32 %v1818, %v1820
        %v1822 = vrot.slane %v1814, %v1821
        %v1824 = vunpack.c.l.s4 1934713408
        %v1825 = vunpack.c.0.s8 %v1824
        %v1826 = vlaneseq
        %v1827 = vshrl.u32 %v1826, 7
        %v1828 = vsub.s32 %v1825, %v1827
        %v1829 = vrot.slane %v1815, %v1828
        %v1830 = vcombine.low %v1806, %v1822
        %v1831 = vcombine.high %v1806, %v1822
        %v1832 = vcombine.low %v1813, %v1829
        %v1833 = vcombine.high %v1813, %v1829
        %1835 = vrot.lane.b32.xlu0 %v1831, 16
        %v1836 = vpop.permute.xlu0 %1835
        %1839 = vrot.lane.b32.xlu0 %v1832, 32
        %v1840 = vpop.permute.xlu0 %1839
        %1843 = vrot.lane.b32.xlu0 %v1833, 48
        %v1844 = vpop.permute.xlu0 %1843
        %v1846 = vsel %vm783, %v1830, %v1836
        %v1847 = vsel %vm250, %v1846, %v1840
        %vm1848 = vcmask 392192
        %v1849 = vsel %vm1848, %v1847, %v1844
        %v1850 = vpack.c.bf16 %v1849, %v1849
        %v1851 = vld [vmem:[%s3] sm:$0xf]
        %v1852 = vld [vmem:[%s3 + $0x4] sm:$0xf]
        %v1853 = vld [vmem:[%s3 + $0x8] sm:$0xf]
        %v1854 = vld [vmem:[%s3 + $0xc] sm:$0xf]
        %v1855 = vld [vmem:[%s3 + $0x10] sm:$0xf]
        %v1856 = vld [vmem:[%s3 + $0x14] sm:$0xf]
        %v1857 = vld [vmem:[%s3 + $0x18] sm:$0xf]
        %v1858 = vld [vmem:[%s3 + $0x1c] sm:$0xf]
        %v1867 = vunpack.c.l.b16 %v1851
        %v1868 = vunpack.c.l.b16 %v1852
        %v1869 = vunpack.c.l.b16 %v1853
        %v1870 = vunpack.c.l.b16 %v1854
        %v1871 = vunpack.c.l.b16 %v1855
        %v1872 = vunpack.c.l.b16 %v1856
        %v1873 = vunpack.c.l.b16 %v1857
        %v1874 = vunpack.c.l.b16 %v1858
        %v1875 = vpack.c.b16 %v1868, %v1867
        %v1876 = vpack.c.b16 %v1870, %v1869
        %v1877 = vpack.c.b16 %v1872, %v1871
        %v1878 = vpack.c.b16 %v1874, %v1873
        %vm1883 = vcmask 523264
        %v1885 = vsel %vm1883, %v1850, 0
        %1887 = vmatprep.subr.bf16.mxu0 0
        %1888 = vmatpush1.bf16.msra.mxu0 %v1875
        %1889 = vmatprep.subr.bf16.mxu0 0
        %1890 = vmatpush1.bf16.msra.mxu0 %v1876
        %1891 = vmatprep.subr.bf16.mxu0 0
        %1892 = vmatpush1.bf16.msra.mxu0 %v1877
        %1893 = vmatprep.subr.bf16.mxu0 0
        %1894 = vmatpush1.bf16.msra.mxu0 %v1878
        %1895 = vmatprep.subr.bf16.mxu0 0
        %1896 = vmatpush1.bf16.msra.mxu0 0
        %1897 = vmatprep.subr.bf16.mxu0 0
        %1898 = vmatpush1.bf16.msra.mxu0 0
        %1899 = vmatprep.subr.bf16.mxu0 0
        %1900 = vmatpush1.bf16.msra.mxu0 0
        %1901 = vmatprep.subr.bf16.mxu0 0
        %1902 = vmatpush1.bf16.msra.mxu0 0
        %1903 = vmatprep.subr.bf16.mxu0 0
        %1904 = vmatpush1.bf16.msra.mxu0 0
        %1905 = vmatprep.subr.bf16.mxu0 0
        %1906 = vmatpush1.bf16.msra.mxu0 0
        %1907 = vmatprep.subr.bf16.mxu0 0
        %1908 = vmatpush1.bf16.msra.mxu0 0
        %1909 = vmatprep.subr.bf16.mxu0 0
        %1910 = vmatpush1.bf16.msra.mxu0 0
        %1911 = vmatprep.subr.bf16.mxu0 0
        %1912 = vmatpush1.bf16.msra.mxu0 0
        %1913 = vmatprep.subr.bf16.mxu0 0
        %1914 = vmatpush1.bf16.msra.mxu0 0
        %1915 = vmatprep.subr.bf16.mxu0 0
        %1916 = vmatpush1.bf16.msra.mxu0 0
        %1917 = vmatprep.subr.bf16.mxu0 0
        %1918 = vmatpush1.bf16.msra.mxu0 0
        %1919 = vmatprep.mubr.bf16.mxu0 0
        %1920 = vmatmul.mubr.bf16.gmra.mrb[0].mxu0 %v1885
        %v1921 = vpop.f32.mrb[0].mxu0
        %v1922 = vadd.f32 0.0, %v1921
        %v1923 = vpop.f32.mrb[0].mxu0
        %v1924 = vpop.f32.mrb[0].mxu0
        %v1925 = vpop.f32.mrb[0].mxu0
        %1926 = vdwg.mxu0
        %1927 = vst.msk [vmem:[%s242] sm:$0xff] %vm250, %v1922
        %s1928 = sand.u32 %s159, 1
        %s1929 = scalar_lea.sflag [#allocation3], %s1928
        %s1930 = sand.u32 %s159, 1
        %s1931 = smul.addr %s1930, 8
        %s1932 = scalar_lea.vmem [#allocation2], %s1931
        // Predicated region
        $region45: #{attention_forward.1} parent=43 // pred_check
          %p1933 = pneg %p169
        $region46: #{attention_forward.1} parent=43 // pred_check_branch
          %1935 = sbr.rel (%p1933) target = $region48
        $region47: #{attention_forward.1} parent=43 // pred_region
          %s1937 = ssub.s32 128, 128
          %1938 = vsyncadd %s1929, %s1937
          %s1939 = smul.addr %s20, 128
          %s1940 = scalar_lea.hbm %s6, %s1939
          %s1942 = sshll.u32 %s1932, 4
          %s1943 = int_to_ptr.vmem [resolvable:$true] %s1942
          %1945 = dma.vmem_to_hbm [thread:$0]  %s1943, 128, %s1940, %s1929
        $region48: #{attention_forward.1} parent=43 // pred_fallthru
          _
      $region44: #{attention_forward.1} parent=5 // pred_fallthru
        _
      %p1946 = scmp.le.s32.totalorder 2, %s15
      // Predicated region
      $region49: #{attention_forward.1} parent=5 // pred_check
        %p1947 = pneg %p1946
      $region50: #{attention_forward.1} parent=5 // pred_check_branch
        %1949 = sbr.rel (%p1947) target = $region52
      $region51: #{attention_forward.1} parent=5 // pred_region
        %s1950 = ssub.s32 %s15, 2
        // Predicated region
        $region53: #{attention_forward.1} parent=51 // pred_check
          %p1951 = pneg %p175
        $region54: #{attention_forward.1} parent=51 // pred_check_branch
          %1953 = sbr.rel (%p1951) target = $region56
        $region55: #{attention_forward.1} parent=51 // pred_region
          %s1954 = sand.u32 %s160, 1
          %s1955 = scalar_lea.sflag [#allocation3], %s1954
          %s1956 = sand.u32 %s160, 1
          %s1957 = smul.addr %s1956, 8
          %s1958 = scalar_lea.vmem [#allocation2], %s1957
          %1959 = dma.done %s1955, 128
        $region56: #{attention_forward.1} parent=51 // pred_fallthru
          _
      $region52: #{attention_forward.1} parent=5 // pred_fallthru
        _
    $region6: #{attention_forward.1} parent=1 // loop_footer
      %s19 = sadd.s32 1, %s15
    $region7: #{attention_forward.1} parent=1 // loop_footer_branch
      %14 = sbr.rel target = $region3
    $region8: #{attention_forward.1} parent=1 // loop_exit
      _
    %1960 = vsyncpa [#allocation3], 1
    %s1961 = scalar_lea.sflag [#allocation3], 1
    %1962 = vsyncpa %s1961, 1

</llo_original>
